<compile_context>
chip_gen: v7x
topology: tpu7x:2x2x1
jax: 0.10.0
libtpu: 0.0.40
codegen_flags: <defaults>
</compile_context>

<pallas_src>
import functools
import math

import jax
import jax.numpy as jnp
from jax.experimental import pallas as pl
from jax.experimental.pallas import tpu as pltpu


# aux slab row indices (all rows zero-padded to W = max(2C, H) f32 lanes)
_BQK1, _BQK2 = 0, 1
_LN1G, _LN1B, _LN2G, _LN2B = 2, 3, 4, 5
_B1, _B2, _BG = 6, 7, 8
_LNG, _LNB = 9, 10
_AUX_ROWS = 11


# ----------------------------------------------------------------------------
# fused DCSA kernel: one grid step == one batch element, everything in VMEM
# ----------------------------------------------------------------------------
def _dcsa_kernel(x1_ref, x2_ref, wqk_ref, gwa_ref, wg_ref, aux_ref, o_ref):
    # x1_ref/x2_ref : [1, T, C] f32
    # wqk_ref       : [2, K*C, 2C]  compute dtype (branch, conv-q|conv-k fused)
    # gwa_ref       : [2C+H, H]     compute dtype ([W1^T ; Wc^T ; W2^T])
    # wg_ref        : [H, 2C]       compute dtype (fused GLU value|gate)
    # aux_ref       : [11, W] f32   (all biases / LayerNorm params, W=max(2C,H))
    # o_ref         : [1, T, C]
    T, C = x1_ref.shape[1], x1_ref.shape[2]
    K = wqk_ref.shape[1] // C
    H = gwa_ref.shape[1]
    cdt = wqk_ref.dtype
    inv_sqrt_c = 1.0 / math.sqrt(C)

    def layer_norm(z, g_row, b_row):                   # torch eps = 1e-5, f32
        mu = jnp.mean(z, axis=-1, keepdims=True)
        var = jnp.mean((z - mu) ** 2, axis=-1, keepdims=True)
        zn = (z - mu) * jax.lax.rsqrt(var + 1e-5)
        return zn * aux_ref[g_row:g_row + 1, :C] + aux_ref[b_row:b_row + 1, :C]

    def branch(x, widx, b_row, g_row, be_row):
        # In-kernel causal padding: K shifted views (sublane roll + zero mask)
        # lane-concatenated -> the whole q/k conv is ONE MXU dot (depth K*C).
        if K > 1:
            row = jax.lax.broadcasted_iota(jnp.int32, (T, C), 0)
        views = []
        for k in range(K):                              # K is small & static
            shift = K - 1 - k
            if shift == 0:
                views.append(x)
            else:
                xs = pltpu.roll(x, shift, axis=0)
                views.append(jnp.where(row >= shift, xs, 0.0))
        xcat = jnp.concatenate(views, axis=-1) if K > 1 else views[0]  # [T,K*C]

        acc = jnp.dot(xcat.astype(cdt), wqk_ref[widx],
                      preferred_element_type=jnp.float32)
        acc = acc + aux_ref[b_row:b_row + 1, :2 * C]
        q = jnp.tanh(acc[:, :C])
        kk = jnp.tanh(acc[:, C:])

        # single-head scaled dot-product self-attention; values = raw input x
        s = jax.lax.dot_general(q.astype(cdt), kk.astype(cdt),
                                (((1,), (1,)), ((), ())),        # q @ k^T
                                preferred_element_type=jnp.float32) * inv_sqrt_c
        m = jnp.max(s, axis=-1, keepdims=True)
        e = jnp.exp(s - m)
        p = e * pl.reciprocal(jnp.sum(e, axis=-1, keepdims=True), approx=True)
        ctx = jnp.dot(p.astype(cdt), x.astype(cdt),
                      preferred_element_type=jnp.float32)
        return layer_norm(ctx + x, g_row, be_row)

    x1n = branch(x1_ref[0], 0, _BQK1, _LN1G, _LN1B)
    x2n = branch(x2_ref[0], 1, _BQK2, _LN2G, _LN2B)

    # GRN: fc1 + context fused into one dot over the lane-concat [x1n | x2n].
    xc = jnp.concatenate([x1n, x2n], axis=-1)                        # [T, 2C]
    h = jnp.dot(xc.astype(cdt), gwa_ref[0:2 * C, :],
                preferred_element_type=jnp.float32) + aux_ref[_B1:_B1 + 1, :H]
    h = jnp.where(h > 0, h, jnp.exp(jnp.minimum(h, 0.0)) - 1.0)      # ELU(a=1)
    h = jnp.dot(h.astype(cdt), gwa_ref[2 * C:2 * C + H, :],
                preferred_element_type=jnp.float32) + aux_ref[_B2:_B2 + 1, :H]

    # fused GLU projection: one [H, 2C] dot, split value / gate halves
    y = jnp.dot(h.astype(cdt), wg_ref[...],
                preferred_element_type=jnp.float32) + aux_ref[_BG:_BG + 1, :2 * C]
    g = y[:, :C] * jax.nn.sigmoid(y[:, C:])

    # AddNorm (trainable_add=False): LayerNorm(glu + residual)
    o_ref[0] = layer_norm(g + x1n, _LNG, _LNB).astype(o_ref.dtype)


# ----------------------------------------------------------------------------
# wrapper: parameter packing + pallas_call
# ----------------------------------------------------------------------------
def _pack_params(params, C, H, K, compute_dtype):
    def conv_flat(w):
        # torch Conv1d weight [Co, Ci, K] -> [K, Ci, Co] -> [K*Ci, Co]
        return jnp.transpose(w, (2, 1, 0)).reshape(K * C, C)

    wqk = jnp.stack([
        jnp.concatenate([conv_flat(params["q1_w"]), conv_flat(params["k1_w"])], -1),
        jnp.concatenate([conv_flat(params["q2_w"]), conv_flat(params["k2_w"])], -1),
    ]).astype(compute_dtype)                                      # [2, K*C, 2C]

    gwa = jnp.concatenate(
        [params["w1"].T, params["wc"].T, params["w2"].T], axis=0
    ).astype(compute_dtype)                                       # [2C+H, H]
    wg = params["wg"].T.astype(compute_dtype)                     # [H, 2C]

    W = max(2 * C, H)

    def row(v):
        v = v.astype(jnp.float32)
        return jnp.pad(v, (0, W - v.shape[0]))

    aux = jnp.stack([
        row(jnp.concatenate([params["q1_b"], params["k1_b"]])),   # _BQK1
        row(jnp.concatenate([params["q2_b"], params["k2_b"]])),   # _BQK2
        row(params["ln1_g"]), row(params["ln1_b"]),               # _LN1G/_LN1B
        row(params["ln2_g"]), row(params["ln2_b"]),               # _LN2G/_LN2B
        row(params["b1"]), row(params["b2"]),                     # _B1/_B2
        row(params["bg"]),                                        # _BG
        row(params["ln_g"]), row(params["ln_b"]),                 # _LNG/_LNB
    ])                                                            # [11, W] f32
    return wqk, gwa, wg, aux


@functools.partial(jax.jit, static_argnames=("compute_dtype",))
def dcsa_forward(x1, x2, params, *, compute_dtype=jnp.bfloat16):
    """DCSA forward (eval, dual input, mask=None). x1, x2: [B, T, C] float32."""
    B, T, C = x1.shape
    H = params["w1"].shape[0]
    K = params["q1_w"].shape[-1]
    wqk, gwa, wg, aux = _pack_params(params, C, H, K, compute_dtype)
    W = aux.shape[1]

    itm = jnp.dtype(compute_dtype).itemsize
    est = (6 * T * C * 4                                           # x/out blocks
           + (2 * K * C * 2 * C + (2 * C + H) * H + H * 2 * C) * itm
           + _AUX_ROWS * W * 4
           + 2 * (T * K * C + T * 2 * C + 3 * T * T + 2 * T * C) * 4
           + T * (2 * C + 2 * H + 2 * C) * 4)
    # explicit scoped-VMEM budget, capped below v7x physical (64 MiB) headroom
    vmem_limit = int(min(max(2 * est, 32 * 2**20), 48 * 2**20))

    return pl.pallas_call(
        _dcsa_kernel,
        out_shape=jax.ShapeDtypeStruct((B, T, C), x1.dtype),
        grid_spec=pltpu.PrefetchScalarGridSpec(
            num_scalar_prefetch=0,
            grid=(B,),
            in_specs=[
                pl.BlockSpec((1, T, C), lambda b: (b, 0, 0)),          # x1
                pl.BlockSpec((1, T, C), lambda b: (b, 0, 0)),          # x2
                pl.BlockSpec((2, K * C, 2 * C), lambda b: (0, 0, 0)),  # conv q/k W
                pl.BlockSpec((2 * C + H, H), lambda b: (0, 0)),        # [W1;Wc;W2]
                pl.BlockSpec((H, 2 * C), lambda b: (0, 0)),            # GLU W
                pl.BlockSpec((_AUX_ROWS, W), lambda b: (0, 0)),        # biases/LN
            ],
            out_specs=pl.BlockSpec((1, T, C), lambda b: (b, 0, 0)),
        ),
        compiler_params=pltpu.CompilerParams(
            dimension_semantics=("parallel",),
            vmem_limit_bytes=vmem_limit,
        ),
    )(x1, x2, wqk, gwa, wg, aux)


# ----------------------------------------------------------------------------
# plain-JAX reference (f32)
# ----------------------------------------------------------------------------
def _layernorm_ref(x, g, b, eps=1e-5):
    mu = jnp.mean(x, -1, keepdims=True)
    var = jnp.mean((x - mu) ** 2, -1, keepdims=True)
    return (x - mu) / jnp.sqrt(var + eps) * g + b


def _causal_conv_ref(x, w, b):
    B, T, C = x.shape
    K = w.shape[-1]
    xp = jnp.pad(x, ((0, 0), (K - 1, 0), (0, 0)))
    y = jnp.zeros((B, T, w.shape[0]), jnp.float32) + b
    for k in range(K):
        y = y + xp[:, k:k + T, :] @ w[:, :, k].T
    return y


def _branch_ref(x, wq, bq, wk, bk, g, b):
    q = jnp.tanh(_causal_conv_ref(x, wq, bq))
    k = jnp.tanh(_causal_conv_ref(x, wk, bk))
    s = jnp.einsum("btd,bsd->bts", q, k) / jnp.sqrt(jnp.float32(x.shape[-1]))
    a = jnp.einsum("bts,bsd->btd", jax.nn.softmax(s, axis=-1), x)
    return _layernorm_ref(a + x, g, b)


def _grn_ref(x, ctx, p):
    h = x @ p["w1"].T + p["b1"] + ctx @ p["wc"].T
    h = jnp.where(h > 0, h, jnp.exp(h) - 1.0)
    h = h @ p["w2"].T + p["b2"]
    y = h @ p["wg"].T + p["bg"]
    C = y.shape[-1] // 2
    glu = y[..., :C] * jax.nn.sigmoid(y[..., C:])
    return _layernorm_ref(glu + x, p["ln_g"], p["ln_b"])


def dcsa_reference(x1, x2, p):
    x1n = _branch_ref(x1, p["q1_w"], p["q1_b"], p["k1_w"], p["k1_b"],
                      p["ln1_g"], p["ln1_b"])
    x2n = _branch_ref(x2, p["q2_w"], p["q2_b"], p["k2_w"], p["k2_b"],
                      p["ln2_g"], p["ln2_b"])
    return _grn_ref(x1n, x2n, p)


# ----------------------------------------------------------------------------
# demo / correctness check
# ----------------------------------------------------------------------------
if __name__ == "__main__":
    B, T, C, H, K = 2, 8, 32, 32, 3   # batch, seq, input_size, hidden_size, kernel

    key = jax.random.PRNGKey(0)
    ks = jax.random.split(key, 14)

    def conv_w(k):
        return jax.random.normal(k, (C, C, K), jnp.float32) / math.sqrt(C * K)

    def conv_b(k):
        return jax.random.uniform(k, (C,), jnp.float32, minval=-0.1, maxval=0.1)

    xav1 = math.sqrt(6.0 / (C + H))
    xav2 = math.sqrt(6.0 / (H + 2 * C))
    params = dict(
        q1_w=conv_w(ks[0]), q1_b=conv_b(ks[1]),
        k1_w=conv_w(ks[2]), k1_b=conv_b(ks[3]),
        q2_w=conv_w(ks[4]), q2_b=conv_b(ks[5]),
        k2_w=conv_w(ks[6]), k2_b=conv_b(ks[7]),
        ln1_g=jnp.ones((C,), jnp.float32), ln1_b=jnp.zeros((C,), jnp.float32),
        ln2_g=jnp.ones((C,), jnp.float32), ln2_b=jnp.zeros((C,), jnp.float32),
        w1=jax.random.normal(ks[8], (H, C), jnp.float32) * math.sqrt(2.0 / C),
        b1=jnp.zeros((H,), jnp.float32),
        wc=jax.random.uniform(ks[9], (H, C), jnp.float32, minval=-xav1, maxval=xav1),
        w2=jax.random.normal(ks[10], (H, H), jnp.float32) * math.sqrt(2.0 / H),
        b2=jnp.zeros((H,), jnp.float32),
        wg=jax.random.uniform(ks[11], (2 * C, H), jnp.float32, minval=-xav2, maxval=xav2),
        bg=jnp.zeros((2 * C,), jnp.float32),
        ln_g=jnp.ones((C,), jnp.float32), ln_b=jnp.zeros((C,), jnp.float32),
    )

    x1 = jax.random.normal(ks[12], (B, T, C), dtype=jnp.float32)
    x2 = jax.random.normal(ks[13], (B, T, C), dtype=jnp.float32)

    with jax.default_matmul_precision("float32"):
        ref = dcsa_reference(x1, x2, params)
    ref = jax.block_until_ready(ref)

    # f32 compute path: tight-ish semantic check (tolerance allows the
    # EUP approximate-reciprocal softmax normalization).
    out_f32 = jax.block_until_ready(
        dcsa_forward(x1, x2, params, compute_dtype=jnp.float32))
    assert out_f32.shape == (B, T, C)
    assert bool(jnp.all(jnp.isfinite(out_f32)))
    assert bool(jnp.allclose(out_f32, ref, atol=1e-2, rtol=1e-2)), (
        "f32 mismatch, max abs diff = %f" % float(jnp.max(jnp.abs(out_f32 - ref))))

    # Default bf16 matmul path (halved HBM/MXU cost): loose numerical check.
    out_bf = jax.block_until_ready(dcsa_forward(x1, x2, params))
    assert out_bf.shape == (B, T, C)
    assert bool(jnp.all(jnp.isfinite(out_bf)))
    assert float(jnp.max(jnp.abs(out_bf - ref))) < 0.3

    print("KERNEL_OK")
</pallas_src>

<mosaic_0001>
module attributes {stable_mosaic.version = 11 : i64} {
  func.func @_dcsa_kernel(%arg0: i32, %arg1: memref<1x8x32xf32, #tpu.memory_space<vmem>>, %arg2: memref<1x8x32xf32, #tpu.memory_space<vmem>>, %arg3: memref<2x96x64xf32, #tpu.memory_space<vmem>>, %arg4: memref<96x32xf32, #tpu.memory_space<vmem>>, %arg5: memref<32x64xf32, #tpu.memory_space<vmem>>, %arg6: memref<11x64xf32, #tpu.memory_space<vmem>>, %arg7: memref<1x8x32xf32, #tpu.memory_space<vmem>>) attributes {dimension_semantics = [#tpu.dimension_semantics<parallel>], iteration_bounds = array<i64: 2>, scalar_prefetch = 0 : i64, scratch_operands = 0 : i64, tpu.core_type = #tpu.core_type<tc>, window_params = [{transform_indices = @transform_0, window_bounds = array<i64: 1, 8, 32>}, {transform_indices = @transform_1, window_bounds = array<i64: 1, 8, 32>}, {pipeline_mode = #tpu.pipeline_mode<synchronous>, transform_indices = @transform_2, window_bounds = array<i64: 2, 96, 64>}, {pipeline_mode = #tpu.pipeline_mode<synchronous>, transform_indices = @transform_3, window_bounds = array<i64: 96, 32>}, {pipeline_mode = #tpu.pipeline_mode<synchronous>, transform_indices = @transform_4, window_bounds = array<i64: 32, 64>}, {pipeline_mode = #tpu.pipeline_mode<synchronous>, transform_indices = @transform_5, window_bounds = array<i64: 11, 64>}, {transform_indices = @transform_6, window_bounds = array<i64: 1, 8, 32>}]} {
    %c0 = arith.constant 0 : index
    %c0_0 = arith.constant 0 : index
    %c0_1 = arith.constant 0 : index
    %0 = vector.load %arg1[%c0, %c0_0, %c0_1] : memref<1x8x32xf32, #tpu.memory_space<vmem>>, vector<1x8x32xf32>
    %1 = vector.shape_cast %0 : vector<1x8x32xf32> to vector<8x32xf32>
    %2 = tpu.iota {dimensions = array<i32: 0>} : vector<8x32xi32>
    %c2_i32 = arith.constant 2 : i32
    %3 = tpu.dynamic_rotate %1 by %c2_i32 dim 0 : vector<8x32xf32>, i32 -> vector<8x32xf32>
    %c2_i32_2 = arith.constant 2 : i32
    %4 = vector.broadcast %c2_i32_2 : i32 to vector<8x32xi32>
    %5 = arith.cmpi sge, %2, %4 : vector<8x32xi32>
    %cst = arith.constant 0.000000e+00 : f32
    %6 = vector.broadcast %cst : f32 to vector<8x32xf32>
    %7 = arith.select %5, %3, %6 : vector<8x32xi1>, vector<8x32xf32>
    %c1_i32 = arith.constant 1 : i32
    %8 = tpu.dynamic_rotate %1 by %c1_i32 dim 0 : vector<8x32xf32>, i32 -> vector<8x32xf32>
    %c1_i32_3 = arith.constant 1 : i32
    %9 = vector.broadcast %c1_i32_3 : i32 to vector<8x32xi32>
    %10 = arith.cmpi sge, %2, %9 : vector<8x32xi32>
    %cst_4 = arith.constant 0.000000e+00 : f32
    %11 = vector.broadcast %cst_4 : f32 to vector<8x32xf32>
    %12 = arith.select %10, %8, %11 : vector<8x32xi1>, vector<8x32xf32>
    %13 = tpu.concatenate %7, %12, %1 in 1 : vector<8x32xf32>, vector<8x32xf32>, vector<8x32xf32> -> vector<8x96xf32>
    %c0_5 = arith.constant 0 : index
    %c0_6 = arith.constant 0 : index
    %c0_7 = arith.constant 0 : index
    %14 = vector.load %arg3[%c0_5, %c0_6, %c0_7] : memref<2x96x64xf32, #tpu.memory_space<vmem>>, vector<1x96x64xf32>
    %15 = vector.shape_cast %14 : vector<1x96x64xf32> to vector<96x64xf32>
    %cst_8 = arith.constant dense<0.000000e+00> : vector<8x64xf32>
    %16 = tpu.matmul %13, %15, %cst_8 {dimension_numbers = #tpu.dot_dimension_numbers<[1], [0], [0], [1], [0, 0, 1, 1], [], []>} : vector<8x96xf32>, vector<96x64xf32>, vector<8x64xf32> -> vector<8x64xf32>
    %c0_9 = arith.constant 0 : index
    %c0_10 = arith.constant 0 : index
    %17 = vector.load %arg6[%c0_9, %c0_10] : memref<11x64xf32, #tpu.memory_space<vmem>>, vector<1x64xf32>
    %18 = vector.broadcast %17 : vector<1x64xf32> to vector<8x64xf32>
    %19 = arith.addf %16, %18 : vector<8x64xf32>
    %20 = vector.extract_strided_slice %19 {offsets = [0, 0], sizes = [8, 32], strides = [1, 1]} : vector<8x64xf32> to vector<8x32xf32>
    %21 = math.tanh %20 : vector<8x32xf32>
    %22 = vector.extract_strided_slice %19 {offsets = [0, 32], sizes = [8, 32], strides = [1, 1]} : vector<8x64xf32> to vector<8x32xf32>
    %23 = math.tanh %22 : vector<8x32xf32>
    %cst_11 = arith.constant dense<0.000000e+00> : vector<8x8xf32>
    %24 = tpu.matmul %21, %23, %cst_11 {dimension_numbers = #tpu.dot_dimension_numbers<[1], [1], [0], [0], [0, 0, 1, 0], [], []>} : vector<8x32xf32>, vector<8x32xf32>, vector<8x8xf32> -> vector<8x8xf32>
    %cst_12 = arith.constant 0.176776692 : f32
    %25 = vector.broadcast %cst_12 : f32 to vector<8x8xf32>
    %26 = arith.mulf %24, %25 : vector<8x8xf32>
    %cst_13 = arith.constant dense<0xFF800000> : vector<8xf32>
    %27 = vector.multi_reduction <maximumf>, %26, %cst_13 [1] : vector<8x8xf32> to vector<8xf32>
    %28 = vector.shape_cast %27 : vector<8xf32> to vector<8x1xf32>
    %29 = vector.broadcast %28 : vector<8x1xf32> to vector<8x8xf32>
    %30 = arith.subf %26, %29 : vector<8x8xf32>
    %31 = math.exp %30 : vector<8x8xf32>
    %cst_14 = arith.constant dense<0.000000e+00> : vector<8xf32>
    %32 = vector.multi_reduction <add>, %31, %cst_14 [1] : vector<8x8xf32> to vector<8xf32>
    %33 = vector.shape_cast %32 : vector<8xf32> to vector<8x1xf32>
    %34 = tpu.reciprocal %33 {approx = true} : vector<8x1xf32> -> vector<8x1xf32>
    %35 = vector.broadcast %34 : vector<8x1xf32> to vector<8x8xf32>
    %36 = arith.mulf %31, %35 : vector<8x8xf32>
    %cst_15 = arith.constant dense<0.000000e+00> : vector<8x32xf32>
    %37 = tpu.matmul %36, %1, %cst_15 {dimension_numbers = #tpu.dot_dimension_numbers<[1], [0], [0], [1], [0, 0, 1, 1], [], []>} : vector<8x8xf32>, vector<8x32xf32>, vector<8x32xf32> -> vector<8x32xf32>
    %38 = arith.addf %37, %1 : vector<8x32xf32>
    %cst_16 = arith.constant dense<0.000000e+00> : vector<8xf32>
    %39 = vector.multi_reduction <add>, %38, %cst_16 [1] : vector<8x32xf32> to vector<8xf32>
    %40 = vector.shape_cast %39 : vector<8xf32> to vector<8x1xf32>
    %cst_17 = arith.constant 3.200000e+01 : f32
    %41 = vector.broadcast %cst_17 : f32 to vector<8x1xf32>
    %42 = arith.divf %40, %41 : vector<8x1xf32>
    %43 = vector.broadcast %42 : vector<8x1xf32> to vector<8x32xf32>
    %44 = arith.subf %38, %43 : vector<8x32xf32>
    %45 = arith.mulf %44, %44 : vector<8x32xf32>
    %cst_18 = arith.constant dense<0.000000e+00> : vector<8xf32>
    %46 = vector.multi_reduction <add>, %45, %cst_18 [1] : vector<8x32xf32> to vector<8xf32>
    %47 = vector.shape_cast %46 : vector<8xf32> to vector<8x1xf32>
    %cst_19 = arith.constant 3.200000e+01 : f32
    %48 = vector.broadcast %cst_19 : f32 to vector<8x1xf32>
    %49 = arith.divf %47, %48 : vector<8x1xf32>
    %50 = vector.broadcast %42 : vector<8x1xf32> to vector<8x32xf32>
    %51 = arith.subf %38, %50 : vector<8x32xf32>
    %cst_20 = arith.constant 9.99999974E-6 : f32
    %52 = vector.broadcast %cst_20 : f32 to vector<8x1xf32>
    %53 = arith.addf %49, %52 : vector<8x1xf32>
    %54 = math.rsqrt %53 : vector<8x1xf32>
    %55 = vector.broadcast %54 : vector<8x1xf32> to vector<8x32xf32>
    %56 = arith.mulf %51, %55 : vector<8x32xf32>
    %c2 = arith.constant 2 : index
    %c0_21 = arith.constant 0 : index
    %57 = vector.load %arg6[%c2, %c0_21] : memref<11x64xf32, #tpu.memory_space<vmem>>, vector<1x32xf32>
    %58 = vector.broadcast %57 : vector<1x32xf32> to vector<8x32xf32>
    %59 = arith.mulf %56, %58 : vector<8x32xf32>
    %c3 = arith.constant 3 : index
    %c0_22 = arith.constant 0 : index
    %60 = vector.load %arg6[%c3, %c0_22] : memref<11x64xf32, #tpu.memory_space<vmem>>, vector<1x32xf32>
    %61 = vector.broadcast %60 : vector<1x32xf32> to vector<8x32xf32>
    %62 = arith.addf %59, %61 : vector<8x32xf32>
    %c0_23 = arith.constant 0 : index
    %c0_24 = arith.constant 0 : index
    %c0_25 = arith.constant 0 : index
    %63 = vector.load %arg2[%c0_23, %c0_24, %c0_25] : memref<1x8x32xf32, #tpu.memory_space<vmem>>, vector<1x8x32xf32>
    %64 = vector.shape_cast %63 : vector<1x8x32xf32> to vector<8x32xf32>
    %65 = tpu.iota {dimensions = array<i32: 0>} : vector<8x32xi32>
    %c2_i32_26 = arith.constant 2 : i32
    %66 = tpu.dynamic_rotate %64 by %c2_i32_26 dim 0 : vector<8x32xf32>, i32 -> vector<8x32xf32>
    %c2_i32_27 = arith.constant 2 : i32
    %67 = vector.broadcast %c2_i32_27 : i32 to vector<8x32xi32>
    %68 = arith.cmpi sge, %65, %67 : vector<8x32xi32>
    %cst_28 = arith.constant 0.000000e+00 : f32
    %69 = vector.broadcast %cst_28 : f32 to vector<8x32xf32>
    %70 = arith.select %68, %66, %69 : vector<8x32xi1>, vector<8x32xf32>
    %c1_i32_29 = arith.constant 1 : i32
    %71 = tpu.dynamic_rotate %64 by %c1_i32_29 dim 0 : vector<8x32xf32>, i32 -> vector<8x32xf32>
    %c1_i32_30 = arith.constant 1 : i32
    %72 = vector.broadcast %c1_i32_30 : i32 to vector<8x32xi32>
    %73 = arith.cmpi sge, %65, %72 : vector<8x32xi32>
    %cst_31 = arith.constant 0.000000e+00 : f32
    %74 = vector.broadcast %cst_31 : f32 to vector<8x32xf32>
    %75 = arith.select %73, %71, %74 : vector<8x32xi1>, vector<8x32xf32>
    %76 = tpu.concatenate %70, %75, %64 in 1 : vector<8x32xf32>, vector<8x32xf32>, vector<8x32xf32> -> vector<8x96xf32>
    %c1 = arith.constant 1 : index
    %c0_32 = arith.constant 0 : index
    %c0_33 = arith.constant 0 : index
    %77 = vector.load %arg3[%c1, %c0_32, %c0_33] : memref<2x96x64xf32, #tpu.memory_space<vmem>>, vector<1x96x64xf32>
    %78 = vector.shape_cast %77 : vector<1x96x64xf32> to vector<96x64xf32>
    %cst_34 = arith.constant dense<0.000000e+00> : vector<8x64xf32>
    %79 = tpu.matmul %76, %78, %cst_34 {dimension_numbers = #tpu.dot_dimension_numbers<[1], [0], [0], [1], [0, 0, 1, 1], [], []>} : vector<8x96xf32>, vector<96x64xf32>, vector<8x64xf32> -> vector<8x64xf32>
    %c1_35 = arith.constant 1 : index
    %c0_36 = arith.constant 0 : index
    %80 = vector.load %arg6[%c1_35, %c0_36] : memref<11x64xf32, #tpu.memory_space<vmem>>, vector<1x64xf32>
    %81 = vector.broadcast %80 : vector<1x64xf32> to vector<8x64xf32>
    %82 = arith.addf %79, %81 : vector<8x64xf32>
    %83 = vector.extract_strided_slice %82 {offsets = [0, 0], sizes = [8, 32], strides = [1, 1]} : vector<8x64xf32> to vector<8x32xf32>
    %84 = math.tanh %83 : vector<8x32xf32>
    %85 = vector.extract_strided_slice %82 {offsets = [0, 32], sizes = [8, 32], strides = [1, 1]} : vector<8x64xf32> to vector<8x32xf32>
    %86 = math.tanh %85 : vector<8x32xf32>
    %cst_37 = arith.constant dense<0.000000e+00> : vector<8x8xf32>
    %87 = tpu.matmul %84, %86, %cst_37 {dimension_numbers = #tpu.dot_dimension_numbers<[1], [1], [0], [0], [0, 0, 1, 0], [], []>} : vector<8x32xf32>, vector<8x32xf32>, vector<8x8xf32> -> vector<8x8xf32>
    %cst_38 = arith.constant 0.176776692 : f32
    %88 = vector.broadcast %cst_38 : f32 to vector<8x8xf32>
    %89 = arith.mulf %87, %88 : vector<8x8xf32>
    %cst_39 = arith.constant dense<0xFF800000> : vector<8xf32>
    %90 = vector.multi_reduction <maximumf>, %89, %cst_39 [1] : vector<8x8xf32> to vector<8xf32>
    %91 = vector.shape_cast %90 : vector<8xf32> to vector<8x1xf32>
    %92 = vector.broadcast %91 : vector<8x1xf32> to vector<8x8xf32>
    %93 = arith.subf %89, %92 : vector<8x8xf32>
    %94 = math.exp %93 : vector<8x8xf32>
    %cst_40 = arith.constant dense<0.000000e+00> : vector<8xf32>
    %95 = vector.multi_reduction <add>, %94, %cst_40 [1] : vector<8x8xf32> to vector<8xf32>
    %96 = vector.shape_cast %95 : vector<8xf32> to vector<8x1xf32>
    %97 = tpu.reciprocal %96 {approx = true} : vector<8x1xf32> -> vector<8x1xf32>
    %98 = vector.broadcast %97 : vector<8x1xf32> to vector<8x8xf32>
    %99 = arith.mulf %94, %98 : vector<8x8xf32>
    %cst_41 = arith.constant dense<0.000000e+00> : vector<8x32xf32>
    %100 = tpu.matmul %99, %64, %cst_41 {dimension_numbers = #tpu.dot_dimension_numbers<[1], [0], [0], [1], [0, 0, 1, 1], [], []>} : vector<8x8xf32>, vector<8x32xf32>, vector<8x32xf32> -> vector<8x32xf32>
    %101 = arith.addf %100, %64 : vector<8x32xf32>
    %cst_42 = arith.constant dense<0.000000e+00> : vector<8xf32>
    %102 = vector.multi_reduction <add>, %101, %cst_42 [1] : vector<8x32xf32> to vector<8xf32>
    %103 = vector.shape_cast %102 : vector<8xf32> to vector<8x1xf32>
    %cst_43 = arith.constant 3.200000e+01 : f32
    %104 = vector.broadcast %cst_43 : f32 to vector<8x1xf32>
    %105 = arith.divf %103, %104 : vector<8x1xf32>
    %106 = vector.broadcast %105 : vector<8x1xf32> to vector<8x32xf32>
    %107 = arith.subf %101, %106 : vector<8x32xf32>
    %108 = arith.mulf %107, %107 : vector<8x32xf32>
    %cst_44 = arith.constant dense<0.000000e+00> : vector<8xf32>
    %109 = vector.multi_reduction <add>, %108, %cst_44 [1] : vector<8x32xf32> to vector<8xf32>
    %110 = vector.shape_cast %109 : vector<8xf32> to vector<8x1xf32>
    %cst_45 = arith.constant 3.200000e+01 : f32
    %111 = vector.broadcast %cst_45 : f32 to vector<8x1xf32>
    %112 = arith.divf %110, %111 : vector<8x1xf32>
    %113 = vector.broadcast %105 : vector<8x1xf32> to vector<8x32xf32>
    %114 = arith.subf %101, %113 : vector<8x32xf32>
    %cst_46 = arith.constant 9.99999974E-6 : f32
    %115 = vector.broadcast %cst_46 : f32 to vector<8x1xf32>
    %116 = arith.addf %112, %115 : vector<8x1xf32>
    %117 = math.rsqrt %116 : vector<8x1xf32>
    %118 = vector.broadcast %117 : vector<8x1xf32> to vector<8x32xf32>
    %119 = arith.mulf %114, %118 : vector<8x32xf32>
    %c4 = arith.constant 4 : index
    %c0_47 = arith.constant 0 : index
    %120 = vector.load %arg6[%c4, %c0_47] : memref<11x64xf32, #tpu.memory_space<vmem>>, vector<1x32xf32>
    %121 = vector.broadcast %120 : vector<1x32xf32> to vector<8x32xf32>
    %122 = arith.mulf %119, %121 : vector<8x32xf32>
    %c5 = arith.constant 5 : index
    %c0_48 = arith.constant 0 : index
    %123 = vector.load %arg6[%c5, %c0_48] : memref<11x64xf32, #tpu.memory_space<vmem>>, vector<1x32xf32>
    %124 = vector.broadcast %123 : vector<1x32xf32> to vector<8x32xf32>
    %125 = arith.addf %122, %124 : vector<8x32xf32>
    %126 = tpu.concatenate %62, %125 in 1 : vector<8x32xf32>, vector<8x32xf32> -> vector<8x64xf32>
    %c0_49 = arith.constant 0 : index
    %c0_50 = arith.constant 0 : index
    %127 = vector.load %arg4[%c0_49, %c0_50] : memref<96x32xf32, #tpu.memory_space<vmem>>, vector<64x32xf32>
    %cst_51 = arith.constant dense<0.000000e+00> : vector<8x32xf32>
    %128 = tpu.matmul %126, %127, %cst_51 {dimension_numbers = #tpu.dot_dimension_numbers<[1], [0], [0], [1], [0, 0, 1, 1], [], []>} : vector<8x64xf32>, vector<64x32xf32>, vector<8x32xf32> -> vector<8x32xf32>
    %c6 = arith.constant 6 : index
    %c0_52 = arith.constant 0 : index
    %129 = vector.load %arg6[%c6, %c0_52] : memref<11x64xf32, #tpu.memory_space<vmem>>, vector<1x32xf32>
    %130 = vector.broadcast %129 : vector<1x32xf32> to vector<8x32xf32>
    %131 = arith.addf %128, %130 : vector<8x32xf32>
    %cst_53 = arith.constant 0.000000e+00 : f32
    %132 = vector.broadcast %cst_53 : f32 to vector<8x32xf32>
    %133 = arith.cmpf ogt, %131, %132 : vector<8x32xf32>
    %cst_54 = arith.constant 0.000000e+00 : f32
    %134 = vector.broadcast %cst_54 : f32 to vector<8x32xf32>
    %135 = arith.minimumf %131, %134 : vector<8x32xf32>
    %136 = math.exp %135 : vector<8x32xf32>
    %cst_55 = arith.constant 1.000000e+00 : f32
    %137 = vector.broadcast %cst_55 : f32 to vector<8x32xf32>
    %138 = arith.subf %136, %137 : vector<8x32xf32>
    %139 = arith.select %133, %131, %138 : vector<8x32xi1>, vector<8x32xf32>
    %c64 = arith.constant 64 : index
    %c0_56 = arith.constant 0 : index
    %140 = vector.load %arg4[%c64, %c0_56] : memref<96x32xf32, #tpu.memory_space<vmem>>, vector<32x32xf32>
    %cst_57 = arith.constant dense<0.000000e+00> : vector<8x32xf32>
    %141 = tpu.matmul %139, %140, %cst_57 {dimension_numbers = #tpu.dot_dimension_numbers<[1], [0], [0], [1], [0, 0, 1, 1], [], []>} : vector<8x32xf32>, vector<32x32xf32>, vector<8x32xf32> -> vector<8x32xf32>
    %c7 = arith.constant 7 : index
    %c0_58 = arith.constant 0 : index
    %142 = vector.load %arg6[%c7, %c0_58] : memref<11x64xf32, #tpu.memory_space<vmem>>, vector<1x32xf32>
    %143 = vector.broadcast %142 : vector<1x32xf32> to vector<8x32xf32>
    %144 = arith.addf %141, %143 : vector<8x32xf32>
    %c0_59 = arith.constant 0 : index
    %c0_60 = arith.constant 0 : index
    %145 = vector.load %arg5[%c0_59, %c0_60] : memref<32x64xf32, #tpu.memory_space<vmem>>, vector<32x64xf32>
    %cst_61 = arith.constant dense<0.000000e+00> : vector<8x64xf32>
    %146 = tpu.matmul %144, %145, %cst_61 {dimension_numbers = #tpu.dot_dimension_numbers<[1], [0], [0], [1], [0, 0, 1, 1], [], []>} : vector<8x32xf32>, vector<32x64xf32>, vector<8x64xf32> -> vector<8x64xf32>
    %c8 = arith.constant 8 : index
    %c0_62 = arith.constant 0 : index
    %147 = vector.load %arg6[%c8, %c0_62] : memref<11x64xf32, #tpu.memory_space<vmem>>, vector<1x64xf32>
    %148 = vector.broadcast %147 : vector<1x64xf32> to vector<8x64xf32>
    %149 = arith.addf %146, %148 : vector<8x64xf32>
    %150 = vector.extract_strided_slice %149 {offsets = [0, 0], sizes = [8, 32], strides = [1, 1]} : vector<8x64xf32> to vector<8x32xf32>
    %151 = vector.extract_strided_slice %149 {offsets = [0, 32], sizes = [8, 32], strides = [1, 1]} : vector<8x64xf32> to vector<8x32xf32>
    %152 = arith.negf %151 : vector<8x32xf32>
    %153 = math.exp %152 : vector<8x32xf32>
    %cst_63 = arith.constant 1.000000e+00 : f32
    %154 = vector.broadcast %cst_63 : f32 to vector<8x32xf32>
    %155 = arith.addf %154, %153 : vector<8x32xf32>
    %156 = arith.divf %154, %155 : vector<8x32xf32>
    %157 = arith.mulf %150, %156 : vector<8x32xf32>
    %158 = arith.addf %157, %62 : vector<8x32xf32>
    %cst_64 = arith.constant dense<0.000000e+00> : vector<8xf32>
    %159 = vector.multi_reduction <add>, %158, %cst_64 [1] : vector<8x32xf32> to vector<8xf32>
    %160 = vector.shape_cast %159 : vector<8xf32> to vector<8x1xf32>
    %cst_65 = arith.constant 3.200000e+01 : f32
    %161 = vector.broadcast %cst_65 : f32 to vector<8x1xf32>
    %162 = arith.divf %160, %161 : vector<8x1xf32>
    %163 = vector.broadcast %162 : vector<8x1xf32> to vector<8x32xf32>
    %164 = arith.subf %158, %163 : vector<8x32xf32>
    %165 = arith.mulf %164, %164 : vector<8x32xf32>
    %cst_66 = arith.constant dense<0.000000e+00> : vector<8xf32>
    %166 = vector.multi_reduction <add>, %165, %cst_66 [1] : vector<8x32xf32> to vector<8xf32>
    %167 = vector.shape_cast %166 : vector<8xf32> to vector<8x1xf32>
    %cst_67 = arith.constant 3.200000e+01 : f32
    %168 = vector.broadcast %cst_67 : f32 to vector<8x1xf32>
    %169 = arith.divf %167, %168 : vector<8x1xf32>
    %170 = vector.broadcast %162 : vector<8x1xf32> to vector<8x32xf32>
    %171 = arith.subf %158, %170 : vector<8x32xf32>
    %cst_68 = arith.constant 9.99999974E-6 : f32
    %172 = vector.broadcast %cst_68 : f32 to vector<8x1xf32>
    %173 = arith.addf %169, %172 : vector<8x1xf32>
    %174 = math.rsqrt %173 : vector<8x1xf32>
    %175 = vector.broadcast %174 : vector<8x1xf32> to vector<8x32xf32>
    %176 = arith.mulf %171, %175 : vector<8x32xf32>
    %c9 = arith.constant 9 : index
    %c0_69 = arith.constant 0 : index
    %177 = vector.load %arg6[%c9, %c0_69] : memref<11x64xf32, #tpu.memory_space<vmem>>, vector<1x32xf32>
    %178 = vector.broadcast %177 : vector<1x32xf32> to vector<8x32xf32>
    %179 = arith.mulf %176, %178 : vector<8x32xf32>
    %c10 = arith.constant 10 : index
    %c0_70 = arith.constant 0 : index
    %180 = vector.load %arg6[%c10, %c0_70] : memref<11x64xf32, #tpu.memory_space<vmem>>, vector<1x32xf32>
    %181 = vector.broadcast %180 : vector<1x32xf32> to vector<8x32xf32>
    %182 = arith.addf %179, %181 : vector<8x32xf32>
    %c0_71 = arith.constant 0 : index
    %c0_72 = arith.constant 0 : index
    %c0_73 = arith.constant 0 : index
    %183 = vector.load %arg7[%c0_71, %c0_72, %c0_73] : memref<1x8x32xf32, #tpu.memory_space<vmem>>, vector<1x8x32xf32>
    %184 = vector.shape_cast %183 : vector<1x8x32xf32> to vector<8x32xf32>
    %185 = vector.shape_cast %182 : vector<8x32xf32> to vector<1x8x32xf32>
    tpu.vector_store %arg7[%c0_71, %c0_72, %c0_73], %185 {strides = array<i32>} : memref<1x8x32xf32, #tpu.memory_space<vmem>>, vector<1x8x32xf32>,
    return
  }
  func.func @transform_0(%arg0: i32) -> (i32, i32, i32) {
    %c0_i32 = arith.constant 0 : i32
    %c0_i32_0 = arith.constant 0 : i32
    %c0_i32_1 = arith.constant 0 : i32
    return %arg0, %c0_i32, %c0_i32_0 : i32, i32, i32
  }
  func.func @transform_1(%arg0: i32) -> (i32, i32, i32) {
    %c0_i32 = arith.constant 0 : i32
    %c0_i32_0 = arith.constant 0 : i32
    %c0_i32_1 = arith.constant 0 : i32
    return %arg0, %c0_i32, %c0_i32_0 : i32, i32, i32
  }
  func.func @transform_2(%arg0: i32) -> (i32, i32, i32) {
    %c0_i32 = arith.constant 0 : i32
    %c0_i32_0 = arith.constant 0 : i32
    %c0_i32_1 = arith.constant 0 : i32
    %c0_i32_2 = arith.constant 0 : i32
    return %c0_i32, %c0_i32_0, %c0_i32_1 : i32, i32, i32
  }
  func.func @transform_3(%arg0: i32) -> (i32, i32) {
    %c0_i32 = arith.constant 0 : i32
    %c0_i32_0 = arith.constant 0 : i32
    %c0_i32_1 = arith.constant 0 : i32
    return %c0_i32, %c0_i32_0 : i32, i32
  }
  func.func @transform_4(%arg0: i32) -> (i32, i32) {
    %c0_i32 = arith.constant 0 : i32
    %c0_i32_0 = arith.constant 0 : i32
    %c0_i32_1 = arith.constant 0 : i32
    return %c0_i32, %c0_i32_0 : i32, i32
  }
  func.func @transform_5(%arg0: i32) -> (i32, i32) {
    %c0_i32 = arith.constant 0 : i32
    %c0_i32_0 = arith.constant 0 : i32
    %c0_i32_1 = arith.constant 0 : i32
    return %c0_i32, %c0_i32_0 : i32, i32
  }
  func.func @transform_6(%arg0: i32) -> (i32, i32, i32) {
    %c0_i32 = arith.constant 0 : i32
    %c0_i32_0 = arith.constant 0 : i32
    %c0_i32_1 = arith.constant 0 : i32
    return %arg0, %c0_i32, %c0_i32_0 : i32, i32, i32
  }
}

</mosaic_0001>

<llo_original>
// kernel: dcsa_forward.1
$region0: #{dcsa_forward.1}
  #allocation0 [shape = 'u32[]', space=smem, size = 0x4, offset = 0x4, fixed_abs, tag = 'smem constant byte address 0x4 - core index']
  #allocation1 [shape = 'u32[144,128]{1,0:T(1,128)}', space=vmem, size = 0x12000, scoped, tag = 'internal scratch']
  %s0 = inlined_call_operand.vmem [shape: f32[2,8,32], index: 0, kind: input, shape index: {}]
  %s1 = inlined_call_operand.vmem [shape: f32[2,8,32], index: 1, kind: input, shape index: {}]
  %s2 = inlined_call_operand.vmem [shape: f32[2,96,64], index: 2, kind: input, shape index: {}]
  %s3 = inlined_call_operand.vmem [shape: f32[96,32], index: 3, kind: input, shape index: {}]
  %s4 = inlined_call_operand.vmem [shape: f32[32,64], index: 4, kind: input, shape index: {}]
  %s5 = inlined_call_operand.vmem [shape: f32[11,64], index: 5, kind: input, shape index: {}]
  %s6 = inlined_call_operand.hbm [shape: f32[2,8,32], index: 6, kind: output, shape index: {}]
  %s7 = sld [smem:[#allocation0]]
  $region57: #{dcsa_forward.1} parent=0
    _
  %s9 = ssub.s32 1, %s7
  %s10 = scalar_select 0, %s9, %s7
  $region1: #{dcsa_forward.1} parent=0
    #allocation2 [shape = 'u8[8192]{0}', space=vmem, size = 0x2000, scoped, tag = 'output window, operand 0']
    #allocation3 [shape = 's32[2]{0}', space=sflag, size = 0x8, scoped, tag = 'scoped memory for dcsa_forward.1']
    %11 = vsyncpa [#allocation3], 0
    %s12 = scalar_lea.sflag [#allocation3], 1
    %13 = vsyncpa %s12, 0
    loop: start=0, step=1, limit=4
    $region2: #{dcsa_forward.1} parent=1 // loop_pre_header
      _
    $region3: #{dcsa_forward.1} parent=1 // loop_header
      %s15 = sphi 0, %s19
      %p16 = scmp.ge.s32.totalorder %s15, 4
      %s25 = sphi 0, %s27
      %s28 = sphi 0, %s25
      %s29 = sphi 0, %s28
      %s45 = sphi 0, %s29
      %s51 = sphi 0, %s53
      %s54 = sphi 0, %s51
      %s55 = sphi 0, %s54
      %s71 = sphi 0, %s55
      %s75 = sphi 0, %s75
      %s77 = sphi 0, %s75
      %s78 = sphi 0, %s77
      %s92 = sphi 0, %s78
      %s96 = sphi 0, %s96
      %s98 = sphi 0, %s96
      %s99 = sphi 0, %s98
      %s113 = sphi 0, %s99
      %s117 = sphi 0, %s117
      %s119 = sphi 0, %s117
      %s120 = sphi 0, %s119
      %s134 = sphi 0, %s120
      %s138 = sphi 0, %s138
      %s140 = sphi 0, %s138
      %s141 = sphi 0, %s140
      %s155 = sphi 0, %s141
      %s161 = sphi 0, %s163
      %s164 = sphi 0, %s161
      %s165 = sphi 0, %s164
      %s181 = sphi 0, %s165
    $region4: #{dcsa_forward.1} parent=1 // loop_header_branch
      %18 = sbr.rel (%p16) target = $region8
    $region5: #{dcsa_forward.1} parent=1 // loop_body
      %s20 = ssub.s32 %s15, 1
      %s21 = ssub.s32 %s15, 2
      %s22 = sadd.s32 %s15, 1
      %s23 = ssub.s32 %s15, %s22
      %p24 = scmp.eq.s32.totalorder %s23, 0
      %s26 = sadd.s32 %s25, 1
      %s27 = scalar_select %p24, %s25, %s26
      %p30 = pneg %p24
      %p31 = scmp.eq.s32.totalorder %s15, 1
      %p32 = por %p30, %p31
      %p33 = scmp.ne.s32.totalorder %s25, %s28
      %p34 = scmp.eq.s32.totalorder %s15, 0
      %p35 = por %p33, %p34
      %p36 = scmp.ne.s32.totalorder %s25, %s28
      %p37 = scmp.eq.s32.totalorder %s20, 1
      %p38 = por %p36, %p37
      %p39 = scmp.ne.s32.totalorder %s28, %s29
      %p40 = scmp.eq.s32.totalorder %s20, 0
      %p41 = por %p39, %p40
      %p42 = scmp.ne.s32.totalorder %s28, %s29
      %p43 = scmp.eq.s32.totalorder %s21, 1
      %p44 = por %p42, %p43
      %p46 = scmp.ne.s32.totalorder %s29, %s45
      %p47 = scmp.eq.s32.totalorder %s21, 0
      %p48 = por %p46, %p47
      %s49 = ssub.s32 %s15, %s22
      %p50 = scmp.eq.s32.totalorder %s49, 0
      %s52 = sadd.s32 %s51, 1
      %s53 = scalar_select %p50, %s51, %s52
      %p56 = pneg %p50
      %p57 = scmp.eq.s32.totalorder %s15, 1
      %p58 = por %p56, %p57
      %p59 = scmp.ne.s32.totalorder %s51, %s54
      %p60 = scmp.eq.s32.totalorder %s15, 0
      %p61 = por %p59, %p60
      %p62 = scmp.ne.s32.totalorder %s51, %s54
      %p63 = scmp.eq.s32.totalorder %s20, 1
      %p64 = por %p62, %p63
      %p65 = scmp.ne.s32.totalorder %s54, %s55
      %p66 = scmp.eq.s32.totalorder %s20, 0
      %p67 = por %p65, %p66
      %p68 = scmp.ne.s32.totalorder %s54, %s55
      %p69 = scmp.eq.s32.totalorder %s21, 1
      %p70 = por %p68, %p69
      %p72 = scmp.ne.s32.totalorder %s55, %s71
      %p73 = scmp.eq.s32.totalorder %s21, 0
      %p74 = por %p72, %p73
      %s76 = sadd.s32 %s75, 1
      %p79 = scmp.eq.s32.totalorder %s15, 1
      %p80 = scmp.ne.s32.totalorder %s75, %s77
      %p81 = scmp.eq.s32.totalorder %s15, 0
      %p82 = por %p80, %p81
      %p83 = scmp.ne.s32.totalorder %s75, %s77
      %p84 = scmp.eq.s32.totalorder %s20, 1
      %p85 = por %p83, %p84
      %p86 = scmp.ne.s32.totalorder %s77, %s78
      %p87 = scmp.eq.s32.totalorder %s20, 0
      %p88 = por %p86, %p87
      %p89 = scmp.ne.s32.totalorder %s77, %s78
      %p90 = scmp.eq.s32.totalorder %s21, 1
      %p91 = por %p89, %p90
      %p93 = scmp.ne.s32.totalorder %s78, %s92
      %p94 = scmp.eq.s32.totalorder %s21, 0
      %p95 = por %p93, %p94
      %s97 = sadd.s32 %s96, 1
      %p100 = scmp.eq.s32.totalorder %s15, 1
      %p101 = scmp.ne.s32.totalorder %s96, %s98
      %p102 = scmp.eq.s32.totalorder %s15, 0
      %p103 = por %p101, %p102
      %p104 = scmp.ne.s32.totalorder %s96, %s98
      %p105 = scmp.eq.s32.totalorder %s20, 1
      %p106 = por %p104, %p105
      %p107 = scmp.ne.s32.totalorder %s98, %s99
      %p108 = scmp.eq.s32.totalorder %s20, 0
      %p109 = por %p107, %p108
      %p110 = scmp.ne.s32.totalorder %s98, %s99
      %p111 = scmp.eq.s32.totalorder %s21, 1
      %p112 = por %p110, %p111
      %p114 = scmp.ne.s32.totalorder %s99, %s113
      %p115 = scmp.eq.s32.totalorder %s21, 0
      %p116 = por %p114, %p115
      %s118 = sadd.s32 %s117, 1
      %p121 = scmp.eq.s32.totalorder %s15, 1
      %p122 = scmp.ne.s32.totalorder %s117, %s119
      %p123 = scmp.eq.s32.totalorder %s15, 0
      %p124 = por %p122, %p123
      %p125 = scmp.ne.s32.totalorder %s117, %s119
      %p126 = scmp.eq.s32.totalorder %s20, 1
      %p127 = por %p125, %p126
      %p128 = scmp.ne.s32.totalorder %s119, %s120
      %p129 = scmp.eq.s32.totalorder %s20, 0
      %p130 = por %p128, %p129
      %p131 = scmp.ne.s32.totalorder %s119, %s120
      %p132 = scmp.eq.s32.totalorder %s21, 1
      %p133 = por %p131, %p132
      %p135 = scmp.ne.s32.totalorder %s120, %s134
      %p136 = scmp.eq.s32.totalorder %s21, 0
      %p137 = por %p135, %p136
      %s139 = sadd.s32 %s138, 1
      %p142 = scmp.eq.s32.totalorder %s15, 1
      %p143 = scmp.ne.s32.totalorder %s138, %s140
      %p144 = scmp.eq.s32.totalorder %s15, 0
      %p145 = por %p143, %p144
      %p146 = scmp.ne.s32.totalorder %s138, %s140
      %p147 = scmp.eq.s32.totalorder %s20, 1
      %p148 = por %p146, %p147
      %p149 = scmp.ne.s32.totalorder %s140, %s141
      %p150 = scmp.eq.s32.totalorder %s20, 0
      %p151 = por %p149, %p150
      %p152 = scmp.ne.s32.totalorder %s140, %s141
      %p153 = scmp.eq.s32.totalorder %s21, 1
      %p154 = por %p152, %p153
      %p156 = scmp.ne.s32.totalorder %s141, %s155
      %p157 = scmp.eq.s32.totalorder %s21, 0
      %p158 = por %p156, %p157
      %s159 = ssub.s32 %s15, %s22
      %p160 = scmp.eq.s32.totalorder %s159, 0
      %s162 = sadd.s32 %s161, 1
      %s163 = scalar_select %p160, %s161, %s162
      %p166 = pneg %p160
      %p167 = scmp.eq.s32.totalorder %s15, 1
      %p168 = por %p166, %p167
      %p169 = scmp.ne.s32.totalorder %s161, %s164
      %p170 = scmp.eq.s32.totalorder %s15, 0
      %p171 = por %p169, %p170
      %p172 = scmp.ne.s32.totalorder %s161, %s164
      %p173 = scmp.eq.s32.totalorder %s20, 1
      %p174 = por %p172, %p173
      %p175 = scmp.ne.s32.totalorder %s164, %s165
      %p176 = scmp.eq.s32.totalorder %s20, 0
      %p177 = por %p175, %p176
      %p178 = scmp.ne.s32.totalorder %s164, %s165
      %p179 = scmp.eq.s32.totalorder %s21, 1
      %p180 = por %p178, %p179
      %p182 = scmp.ne.s32.totalorder %s165, %s181
      %p183 = scmp.eq.s32.totalorder %s21, 0
      %p184 = por %p182, %p183
      %p185 = scmp.le.s32.totalorder 1, %s15
      %p186 = scmp.lt.s32.totalorder %s15, 3
      %p187 = pnand %p185, %p186
      %p188 = pneg %p187
      // Predicated region
      $region9: #{dcsa_forward.1} parent=5 // pred_check
        _
      $region10: #{dcsa_forward.1} parent=5 // pred_check_branch
        %190 = sbr.rel (%p187) target = $region12
      $region11: #{dcsa_forward.1} parent=5 // pred_region
        %s191 = ssub.s32 %s15, 1
        // Predicated region
        $region13: #{dcsa_forward.1} parent=11 // pred_check
          %p192 = pneg %p88
        $region14: #{dcsa_forward.1} parent=11 // pred_check_branch
          %194 = sbr.rel (%p192) target = $region16
        $region15: #{dcsa_forward.1} parent=11 // pred_region
          _
        $region16: #{dcsa_forward.1} parent=11 // pred_fallthru
          _
        // Predicated region
        $region17: #{dcsa_forward.1} parent=11 // pred_check
          %p195 = pneg %p109
        $region18: #{dcsa_forward.1} parent=11 // pred_check_branch
          %197 = sbr.rel (%p195) target = $region20
        $region19: #{dcsa_forward.1} parent=11 // pred_region
          _
        $region20: #{dcsa_forward.1} parent=11 // pred_fallthru
          _
        // Predicated region
        $region21: #{dcsa_forward.1} parent=11 // pred_check
          %p198 = pneg %p130
        $region22: #{dcsa_forward.1} parent=11 // pred_check_branch
          %200 = sbr.rel (%p198) target = $region24
        $region23: #{dcsa_forward.1} parent=11 // pred_region
          _
        $region24: #{dcsa_forward.1} parent=11 // pred_fallthru
          _
        // Predicated region
        $region25: #{dcsa_forward.1} parent=11 // pred_check
          %p201 = pneg %p151
        $region26: #{dcsa_forward.1} parent=11 // pred_check_branch
          %203 = sbr.rel (%p201) target = $region28
        $region27: #{dcsa_forward.1} parent=11 // pred_region
          _
        $region28: #{dcsa_forward.1} parent=11 // pred_fallthru
          _
      $region12: #{dcsa_forward.1} parent=5 // pred_fallthru
        _
      %p204 = scmp.lt.s32.totalorder %s15, 2
      // Predicated region
      $region29: #{dcsa_forward.1} parent=5 // pred_check
        %p205 = pneg %p204
      $region30: #{dcsa_forward.1} parent=5 // pred_check_branch
        %207 = sbr.rel (%p205) target = $region32
      $region31: #{dcsa_forward.1} parent=5 // pred_region
        // Predicated region
        $region33: #{dcsa_forward.1} parent=31 // pred_check
          %p208 = pneg %p35
        $region34: #{dcsa_forward.1} parent=31 // pred_check_branch
          %210 = sbr.rel (%p208) target = $region36
        $region35: #{dcsa_forward.1} parent=31 // pred_region
          %p211 = scmp.lt.s32.totalorder %s15, 1
          %s212 = scalar_select %p211, %s15, 1
          %s213 = smul.addr %s212, 8
          %s214 = scalar_lea.vmem %s0, %s213
        $region36: #{dcsa_forward.1} parent=31 // pred_fallthru
          _
        // Predicated region
        $region37: #{dcsa_forward.1} parent=31 // pred_check
          %p215 = pneg %p61
        $region38: #{dcsa_forward.1} parent=31 // pred_check_branch
          %217 = sbr.rel (%p215) target = $region40
        $region39: #{dcsa_forward.1} parent=31 // pred_region
          %p218 = scmp.lt.s32.totalorder %s15, 1
          %s219 = scalar_select %p218, %s15, 1
          %s220 = smul.addr %s219, 8
          %s221 = scalar_lea.vmem %s1, %s220
        $region40: #{dcsa_forward.1} parent=31 // pred_fallthru
          _
      $region32: #{dcsa_forward.1} parent=5 // pred_fallthru
        _
      %p222 = scmp.le.s32.totalorder 1, %s15
      %p223 = scmp.lt.s32.totalorder %s15, 3
      %p224 = pnand %p222, %p223
      %p225 = pneg %p224
      // Predicated region
      $region41: #{dcsa_forward.1} parent=5 // pred_check
        _
      $region42: #{dcsa_forward.1} parent=5 // pred_check_branch
        %227 = sbr.rel (%p224) target = $region44
      $region43: #{dcsa_forward.1} parent=5 // pred_region
        %s228 = ssub.s32 %s15, 1
        %p229 = scmp.lt.s32.totalorder %s20, 1
        %s230 = scalar_select %p229, %s20, 1
        %s231 = smul.addr %s230, 8
        %s232 = scalar_lea.vmem %s0, %s231
        %p233 = pneg %p41
        %p234 = pneg %p38
        %p235 = scmp.lt.s32.totalorder %s20, 1
        %s236 = scalar_select %p235, %s20, 1
        %s237 = smul.addr %s236, 8
        %s238 = scalar_lea.vmem %s1, %s237
        %p239 = pneg %p67
        %p240 = pneg %p64
        %p241 = pneg %p88
        %p242 = pneg %p85
        %p243 = pneg %p109
        %p244 = pneg %p106
        %p245 = pneg %p130
        %p246 = pneg %p127
        %p247 = pneg %p151
        %p248 = pneg %p148
        %p249 = pneg %p177
        %p250 = pneg %p174
        %s251 = sand.u32 %s164, 1
        %s252 = scalar_lea.sflag [#allocation3], %s251
        %s253 = sand.u32 %s164, 1
        %s254 = smul.addr %s253, 8
        %s255 = scalar_lea.vmem [#allocation2], %s254
        %p256 = scmp.lt.s32.totalorder %s20, 1
        %s257 = scalar_select %p256, %s20, 1
        %s258 = smul.addr %s257, 8
        %s259 = scalar_lea.vmem %s0, %s258
        %p260 = scmp.lt.s32.totalorder %s20, 1
        %s261 = scalar_select %p260, %s20, 1
        %s262 = smul.addr %s261, 8
        %s263 = scalar_lea.vmem %s1, %s262
        %v264 = vld [vmem:[%s259] sm:$0xff]
        %v265 = vlaneseq
        %v266 = vshrl.u32 %v265, 7
        %v267 = vrot.slane %v264, 6
        %vm268 = vcmp.ge.s32.totalorder %v266, 2
        %v269 = vsel %vm268, %v267, 0.0
        %v270 = vrot.slane %v264, 7
        %vm271 = vcmp.ge.s32.totalorder %v266, 1
        %v272 = vsel %vm271, %v270, 0.0
        %274 = vrot.lane.b32.xlu0 %v272, 32
        %v275 = vpop.permute.xlu0 %274
        %278 = vrot.lane.b32.xlu0 %v264, 64
        %v279 = vpop.permute.xlu0 %278
        %vm281 = vcmask 261120
        %v282 = vsel %vm281, %v269, %v275
        %vm283 = vcmask 523264
        %v284 = vsel %vm283, %v282, %v279
        %v285 = vld [vmem:[%s2] sm:$0xff]
        %v286 = vld [vmem:[%s2 + $0x8] sm:$0xff]
        %v287 = vld [vmem:[%s2 + $0x10] sm:$0xff]
        %v288 = vld [vmem:[%s2 + $0x18] sm:$0xff]
        %v289 = vld [vmem:[%s2 + $0x20] sm:$0xff]
        %v290 = vld [vmem:[%s2 + $0x28] sm:$0xff]
        %v291 = vld [vmem:[%s2 + $0x30] sm:$0xff]
        %v292 = vld [vmem:[%s2 + $0x38] sm:$0xff]
        %v293 = vld [vmem:[%s2 + $0x40] sm:$0xff]
        %v294 = vld [vmem:[%s2 + $0x48] sm:$0xff]
        %v295 = vld [vmem:[%s2 + $0x50] sm:$0xff]
        %v296 = vld [vmem:[%s2 + $0x58] sm:$0xff]
        %v297 = vld [vmem:[%s5] sm:$0x1]
        %v298 = vlaneseq
        %v299 = vshrl.u32 %v298, 7
        %v300 = vsub.s32 0, %v299
        %v301 = vrot.slane %v297, %v300
        %vm302 = vcmask 785408
        %v304 = vsel %vm302, %v284, 0
        %306 = vmatprep.subr.mxu0 0.0
        %307 = vmatpush1.msra.mxu0 %v285
        %308 = vmatprep.subr.mxu0 0.0
        %309 = vmatpush1.msra.mxu0 %v286
        %310 = vmatprep.subr.mxu0 0.0
        %311 = vmatpush1.msra.mxu0 %v287
        %312 = vmatprep.subr.mxu0 0.0
        %313 = vmatpush1.msra.mxu0 %v288
        %314 = vmatprep.subr.mxu0 0.0
        %315 = vmatpush1.msra.mxu0 %v289
        %316 = vmatprep.subr.mxu0 0.0
        %317 = vmatpush1.msra.mxu0 %v290
        %318 = vmatprep.subr.mxu0 0.0
        %319 = vmatpush1.msra.mxu0 %v291
        %320 = vmatprep.subr.mxu0 0.0
        %321 = vmatpush1.msra.mxu0 %v292
        %322 = vmatprep.subr.mxu0 0.0
        %323 = vmatpush1.msra.mxu0 %v293
        %324 = vmatprep.subr.mxu0 0.0
        %325 = vmatpush1.msra.mxu0 %v294
        %326 = vmatprep.subr.mxu0 0.0
        %327 = vmatpush1.msra.mxu0 %v295
        %328 = vmatprep.subr.mxu0 0.0
        %329 = vmatpush1.msra.mxu0 %v296
        %330 = vmatprep.subr.mxu0 0.0
        %331 = vmatpush1.msra.mxu0 0.0
        %332 = vmatprep.subr.mxu0 0.0
        %333 = vmatpush1.msra.mxu0 0.0
        %334 = vmatprep.subr.mxu0 0.0
        %335 = vmatpush1.msra.mxu0 0.0
        %336 = vmatprep.subr.mxu0 0.0
        %337 = vmatpush1.msra.mxu0 0.0
        %338 = vmatprep.subr.mxu0 0.0
        %339 = vmatpush1.msra.mxu0 0.0
        %340 = vmatprep.subr.mxu0 0.0
        %341 = vmatpush1.msra.mxu0 0.0
        %342 = vmatprep.subr.mxu0 0.0
        %343 = vmatpush1.msra.mxu0 0.0
        %344 = vmatprep.subr.mxu0 0.0
        %345 = vmatpush1.msra.mxu0 0.0
        %346 = vmatprep.subr.mxu0 0.0
        %347 = vmatpush1.msra.mxu0 0.0
        %348 = vmatprep.subr.mxu0 0.0
        %349 = vmatpush1.msra.mxu0 0.0
        %350 = vmatprep.subr.mxu0 0.0
        %351 = vmatpush1.msra.mxu0 0.0
        %352 = vmatprep.subr.mxu0 0.0
        %353 = vmatpush1.msra.mxu0 0.0
        %354 = vmatprep.subr.mxu0 0.0
        %355 = vmatpush1.msra.mxu0 0.0
        %356 = vmatprep.subr.mxu0 0.0
        %357 = vmatpush1.msra.mxu0 0.0
        %358 = vmatprep.subr.mxu0 0.0
        %359 = vmatpush1.msra.mxu0 0.0
        %360 = vmatprep.subr.mxu0 0.0
        %361 = vmatpush1.msra.mxu0 0.0
        %362 = vmatprep.subr.mxu0 0.0
        %363 = vmatpush1.msra.mxu0 0.0
        %364 = vmatprep.subr.mxu0 0.0
        %365 = vmatpush1.msra.mxu0 0.0
        %366 = vmatprep.subr.mxu0 0.0
        %367 = vmatpush1.msra.mxu0 0.0
        %368 = vmatprep.subr.mxu0 0.0
        %369 = vmatpush1.msra.mxu0 0.0
        %370 = vmatprep.mubr.f32.mxu0 0.0
        %371 = vmatmul.mubr.f32.gmra.mrb[0].mxu0 %v304
        %v372 = vpop.f32.mrb[0].mxu0
        %v373 = vadd.f32 %v301, %v372
        %v374 = vpop.f32.mrb[0].mxu0
        %375 = vdwg.mxu0
        %v376 = vtanh.pop %v373
        %378 = vrot.lane.b32.xlu0 %v376, 96
        %v379 = vpop.permute.xlu0 %378
        %v380 = vsel %vm281, %v376, 0
        %v382 = vsel %vm281, %v379, 0
        %384 = vmatprep.subr.mxu0 0.0
        %385 = vmatpush1.xpose.msra.mxu0 %v382
        %386 = vmatprep.subr.mxu0 0.0
        %387 = vmatpush1.xpose.msra.mxu0 0.0
        %388 = vmatprep.subr.mxu0 0.0
        %389 = vmatpush1.xpose.msra.mxu0 0.0
        %390 = vmatprep.subr.mxu0 0.0
        %391 = vmatpush1.xpose.msra.mxu0 0.0
        %392 = vmatprep.subr.mxu0 0.0
        %393 = vmatpush1.xpose.msra.mxu0 0.0
        %394 = vmatprep.subr.mxu0 0.0
        %395 = vmatpush1.xpose.msra.mxu0 0.0
        %396 = vmatprep.subr.mxu0 0.0
        %397 = vmatpush1.xpose.msra.mxu0 0.0
        %398 = vmatprep.subr.mxu0 0.0
        %399 = vmatpush1.xpose.msra.mxu0 0.0
        %400 = vmatprep.subr.mxu0 0.0
        %401 = vmatpush1.xpose.msra.mxu0 0.0
        %402 = vmatprep.subr.mxu0 0.0
        %403 = vmatpush1.xpose.msra.mxu0 0.0
        %404 = vmatprep.subr.mxu0 0.0
        %405 = vmatpush1.xpose.msra.mxu0 0.0
        %406 = vmatprep.subr.mxu0 0.0
        %407 = vmatpush1.xpose.msra.mxu0 0.0
        %408 = vmatprep.subr.mxu0 0.0
        %409 = vmatpush1.xpose.msra.mxu0 0.0
        %410 = vmatprep.subr.mxu0 0.0
        %411 = vmatpush1.xpose.msra.mxu0 0.0
        %412 = vmatprep.subr.mxu0 0.0
        %413 = vmatpush1.xpose.msra.mxu0 0.0
        %414 = vmatprep.subr.mxu0 0.0
        %415 = vmatpush1.xpose.msra.mxu0 0.0
        %416 = vmatprep.subr.mxu0 0.0
        %417 = vmatpush1.xpose.msra.mxu0 0.0
        %418 = vmatprep.subr.mxu0 0.0
        %419 = vmatpush1.xpose.msra.mxu0 0.0
        %420 = vmatprep.subr.mxu0 0.0
        %421 = vmatpush1.xpose.msra.mxu0 0.0
        %422 = vmatprep.subr.mxu0 0.0
        %423 = vmatpush1.xpose.msra.mxu0 0.0
        %424 = vmatprep.subr.mxu0 0.0
        %425 = vmatpush1.xpose.msra.mxu0 0.0
        %426 = vmatprep.subr.mxu0 0.0
        %427 = vmatpush1.xpose.msra.mxu0 0.0
        %428 = vmatprep.subr.mxu0 0.0
        %429 = vmatpush1.xpose.msra.mxu0 0.0
        %430 = vmatprep.subr.mxu0 0.0
        %431 = vmatpush1.xpose.msra.mxu0 0.0
        %432 = vmatprep.subr.mxu0 0.0
        %433 = vmatpush1.xpose.msra.mxu0 0.0
        %434 = vmatprep.subr.mxu0 0.0
        %435 = vmatpush1.xpose.msra.mxu0 0.0
        %436 = vmatprep.subr.mxu0 0.0
        %437 = vmatpush1.xpose.msra.mxu0 0.0
        %438 = vmatprep.subr.mxu0 0.0
        %439 = vmatpush1.xpose.msra.mxu0 0.0
        %440 = vmatprep.subr.mxu0 0.0
        %441 = vmatpush1.xpose.msra.mxu0 0.0
        %442 = vmatprep.subr.mxu0 0.0
        %443 = vmatpush1.xpose.msra.mxu0 0.0
        %444 = vmatprep.subr.mxu0 0.0
        %445 = vmatpush1.xpose.msra.mxu0 0.0
        %446 = vmatprep.subr.mxu0 0.0
        %447 = vmatpush1.xpose.msra.mxu0 0.0
        %448 = vmatprep.mubr.f32.mxu0 0.0
        %449 = vmatmul.mubr.f32.gmra.mrb[0].mxu0 %v380
        %v450 = vpop.f32.mrb[0].mxu0
        %v451 = vadd.f32 0.0, %v450
        %v452 = vpop.f32.mrb[0].mxu0
        %453 = vdwg.mxu0
        %v454 = vmul.f32 %v451, 0.17677669
        %vm455 = vcmask 64512
        %v456 = vsel %vm455, %v454, -inf
        %457 = vmax.xlane.f32.xlu0 %v456
        %v458 = vpop.xlane.xlu0 %457
        %v459 = vsub.f32 %v454, %v458
        %v460 = vmul.f32 %v459, 1.442695
        %v461 = vpow.pop %v460
        %v462 = vsel %vm455, %v461, 0.0
        %463 = vadd.xlane.f32.xlu0 %v462
        %v464 = vpop.xlane.xlu0 %463
        %v465 = vrcp.pop %v464
        %v466 = vmul.f32 %v461, %v465
        %v468 = vsel %vm455, %v466, 0
        %470 = vmatprep.subr.mxu0 0.0
        %471 = vmatpush1.msra.mxu0 %v264
        %472 = vmatprep.subr.mxu0 0.0
        %473 = vmatpush1.msra.mxu0 0.0
        %474 = vmatprep.subr.mxu0 0.0
        %475 = vmatpush1.msra.mxu0 0.0
        %476 = vmatprep.subr.mxu0 0.0
        %477 = vmatpush1.msra.mxu0 0.0
        %478 = vmatprep.subr.mxu0 0.0
        %479 = vmatpush1.msra.mxu0 0.0
        %480 = vmatprep.subr.mxu0 0.0
        %481 = vmatpush1.msra.mxu0 0.0
        %482 = vmatprep.subr.mxu0 0.0
        %483 = vmatpush1.msra.mxu0 0.0
        %484 = vmatprep.subr.mxu0 0.0
        %485 = vmatpush1.msra.mxu0 0.0
        %486 = vmatprep.subr.mxu0 0.0
        %487 = vmatpush1.msra.mxu0 0.0
        %488 = vmatprep.subr.mxu0 0.0
        %489 = vmatpush1.msra.mxu0 0.0
        %490 = vmatprep.subr.mxu0 0.0
        %491 = vmatpush1.msra.mxu0 0.0
        %492 = vmatprep.subr.mxu0 0.0
        %493 = vmatpush1.msra.mxu0 0.0
        %494 = vmatprep.subr.mxu0 0.0
        %495 = vmatpush1.msra.mxu0 0.0
        %496 = vmatprep.subr.mxu0 0.0
        %497 = vmatpush1.msra.mxu0 0.0
        %498 = vmatprep.subr.mxu0 0.0
        %499 = vmatpush1.msra.mxu0 0.0
        %500 = vmatprep.subr.mxu0 0.0
        %501 = vmatpush1.msra.mxu0 0.0
        %502 = vmatprep.subr.mxu0 0.0
        %503 = vmatpush1.msra.mxu0 0.0
        %504 = vmatprep.subr.mxu0 0.0
        %505 = vmatpush1.msra.mxu0 0.0
        %506 = vmatprep.subr.mxu0 0.0
        %507 = vmatpush1.msra.mxu0 0.0
        %508 = vmatprep.subr.mxu0 0.0
        %509 = vmatpush1.msra.mxu0 0.0
        %510 = vmatprep.subr.mxu0 0.0
        %511 = vmatpush1.msra.mxu0 0.0
        %512 = vmatprep.subr.mxu0 0.0
        %513 = vmatpush1.msra.mxu0 0.0
        %514 = vmatprep.subr.mxu0 0.0
        %515 = vmatpush1.msra.mxu0 0.0
        %516 = vmatprep.subr.mxu0 0.0
        %517 = vmatpush1.msra.mxu0 0.0
        %518 = vmatprep.subr.mxu0 0.0
        %519 = vmatpush1.msra.mxu0 0.0
        %520 = vmatprep.subr.mxu0 0.0
        %521 = vmatpush1.msra.mxu0 0.0
        %522 = vmatprep.subr.mxu0 0.0
        %523 = vmatpush1.msra.mxu0 0.0
        %524 = vmatprep.subr.mxu0 0.0
        %525 = vmatpush1.msra.mxu0 0.0
        %526 = vmatprep.subr.mxu0 0.0
        %527 = vmatpush1.msra.mxu0 0.0
        %528 = vmatprep.subr.mxu0 0.0
        %529 = vmatpush1.msra.mxu0 0.0
        %530 = vmatprep.subr.mxu0 0.0
        %531 = vmatpush1.msra.mxu0 0.0
        %532 = vmatprep.subr.mxu0 0.0
        %533 = vmatpush1.msra.mxu0 0.0
        %534 = vmatprep.mubr.f32.mxu0 0.0
        %535 = vmatmul.mubr.f32.gmra.mrb[0].mxu0 %v468
        %v536 = vpop.f32.mrb[0].mxu0
        %v537 = vadd.f32 %v264, %v536
        %v538 = vpop.f32.mrb[0].mxu0
        %539 = vdwg.mxu0
        %v540 = vsel %vm281, %v537, 0.0
        %541 = vadd.xlane.f32.xlu0 %v540
        %v542 = vpop.xlane.xlu0 %541
        %v543 = vrcp.pop 32.0
        %v544 = vmul.f32 %v542, %v543
        %v545 = vsub.f32 %v537, %v544
        %v546 = vmul.f32 %v545, %v545
        %v547 = vsel %vm281, %v546, 0.0
        %548 = vadd.xlane.f32.xlu0 %v547
        %v549 = vpop.xlane.xlu0 %548
        %v550 = vmul.f32 %v549, %v543
        %v551 = vadd.f32 %v550, 1e-05
        %v552 = vrsqrt.pop %v551
        %v553 = vmul.f32 %v545, %v552
        %v554 = vld [vmem:[%s5 + $0x2] sm:$0x1]
        %v555 = vlaneseq
        %v556 = vshrl.u32 %v555, 7
        %v557 = vsub.s32 0, %v556
        %v558 = vrot.slane %v554, %v557
        %v559 = vmul.f32 %v553, %v558
        %v560 = vld [vmem:[%s5 + $0x3] sm:$0x1]
        %v561 = vlaneseq
        %v562 = vshrl.u32 %v561, 7
        %v563 = vsub.s32 0, %v562
        %v564 = vrot.slane %v560, %v563
        %v565 = vadd.f32 %v559, %v564
        %v566 = vld [vmem:[%s263] sm:$0xff]
        %v567 = vrot.slane %v566, 6
        %v568 = vsel %vm268, %v567, 0.0
        %v569 = vrot.slane %v566, 7
        %v570 = vsel %vm271, %v569, 0.0
        %572 = vrot.lane.b32.xlu0 %v570, 32
        %v573 = vpop.permute.xlu0 %572
        %576 = vrot.lane.b32.xlu0 %v566, 64
        %v577 = vpop.permute.xlu0 %576
        %v579 = vsel %vm281, %v568, %v573
        %v580 = vsel %vm283, %v579, %v577
        %s581 = scalar_lea.vmem %s2, 96
        %v582 = vld [vmem:[%s581] sm:$0xff]
        %v583 = vld [vmem:[%s581 + $0x8] sm:$0xff]
        %v584 = vld [vmem:[%s581 + $0x10] sm:$0xff]
        %v585 = vld [vmem:[%s581 + $0x18] sm:$0xff]
        %v586 = vld [vmem:[%s581 + $0x20] sm:$0xff]
        %v587 = vld [vmem:[%s581 + $0x28] sm:$0xff]
        %v588 = vld [vmem:[%s581 + $0x30] sm:$0xff]
        %v589 = vld [vmem:[%s581 + $0x38] sm:$0xff]
        %v590 = vld [vmem:[%s581 + $0x40] sm:$0xff]
        %v591 = vld [vmem:[%s581 + $0x48] sm:$0xff]
        %v592 = vld [vmem:[%s581 + $0x50] sm:$0xff]
        %v593 = vld [vmem:[%s581 + $0x58] sm:$0xff]
        %v594 = vld [vmem:[%s5 + $0x1] sm:$0x1]
        %v595 = vlaneseq
        %v596 = vshrl.u32 %v595, 7
        %v597 = vsub.s32 0, %v596
        %v598 = vrot.slane %v594, %v597
        %v600 = vsel %vm302, %v580, 0
        %602 = vmatprep.subr.mxu0 0.0
        %603 = vmatpush1.msra.mxu0 %v582
        %604 = vmatprep.subr.mxu0 0.0
        %605 = vmatpush1.msra.mxu0 %v583
        %606 = vmatprep.subr.mxu0 0.0
        %607 = vmatpush1.msra.mxu0 %v584
        %608 = vmatprep.subr.mxu0 0.0
        %609 = vmatpush1.msra.mxu0 %v585
        %610 = vmatprep.subr.mxu0 0.0
        %611 = vmatpush1.msra.mxu0 %v586
        %612 = vmatprep.subr.mxu0 0.0
        %613 = vmatpush1.msra.mxu0 %v587
        %614 = vmatprep.subr.mxu0 0.0
        %615 = vmatpush1.msra.mxu0 %v588
        %616 = vmatprep.subr.mxu0 0.0
        %617 = vmatpush1.msra.mxu0 %v589
        %618 = vmatprep.subr.mxu0 0.0
        %619 = vmatpush1.msra.mxu0 %v590
        %620 = vmatprep.subr.mxu0 0.0
        %621 = vmatpush1.msra.mxu0 %v591
        %622 = vmatprep.subr.mxu0 0.0
        %623 = vmatpush1.msra.mxu0 %v592
        %624 = vmatprep.subr.mxu0 0.0
        %625 = vmatpush1.msra.mxu0 %v593
        %626 = vmatprep.subr.mxu0 0.0
        %627 = vmatpush1.msra.mxu0 0.0
        %628 = vmatprep.subr.mxu0 0.0
        %629 = vmatpush1.msra.mxu0 0.0
        %630 = vmatprep.subr.mxu0 0.0
        %631 = vmatpush1.msra.mxu0 0.0
        %632 = vmatprep.subr.mxu0 0.0
        %633 = vmatpush1.msra.mxu0 0.0
        %634 = vmatprep.subr.mxu0 0.0
        %635 = vmatpush1.msra.mxu0 0.0
        %636 = vmatprep.subr.mxu0 0.0
        %637 = vmatpush1.msra.mxu0 0.0
        %638 = vmatprep.subr.mxu0 0.0
        %639 = vmatpush1.msra.mxu0 0.0
        %640 = vmatprep.subr.mxu0 0.0
        %641 = vmatpush1.msra.mxu0 0.0
        %642 = vmatprep.subr.mxu0 0.0
        %643 = vmatpush1.msra.mxu0 0.0
        %644 = vmatprep.subr.mxu0 0.0
        %645 = vmatpush1.msra.mxu0 0.0
        %646 = vmatprep.subr.mxu0 0.0
        %647 = vmatpush1.msra.mxu0 0.0
        %648 = vmatprep.subr.mxu0 0.0
        %649 = vmatpush1.msra.mxu0 0.0
        %650 = vmatprep.subr.mxu0 0.0
        %651 = vmatpush1.msra.mxu0 0.0
        %652 = vmatprep.subr.mxu0 0.0
        %653 = vmatpush1.msra.mxu0 0.0
        %654 = vmatprep.subr.mxu0 0.0
        %655 = vmatpush1.msra.mxu0 0.0
        %656 = vmatprep.subr.mxu0 0.0
        %657 = vmatpush1.msra.mxu0 0.0
        %658 = vmatprep.subr.mxu0 0.0
        %659 = vmatpush1.msra.mxu0 0.0
        %660 = vmatprep.subr.mxu0 0.0
        %661 = vmatpush1.msra.mxu0 0.0
        %662 = vmatprep.subr.mxu0 0.0
        %663 = vmatpush1.msra.mxu0 0.0
        %664 = vmatprep.subr.mxu0 0.0
        %665 = vmatpush1.msra.mxu0 0.0
        %666 = vmatprep.mubr.f32.mxu0 0.0
        %667 = vmatmul.mubr.f32.gmra.mrb[0].mxu0 %v600
        %v668 = vpop.f32.mrb[0].mxu0
        %v669 = vadd.f32 %v598, %v668
        %v670 = vpop.f32.mrb[0].mxu0
        %671 = vdwg.mxu0
        %v672 = vtanh.pop %v669
        %674 = vrot.lane.b32.xlu0 %v672, 96
        %v675 = vpop.permute.xlu0 %674
        %v676 = vsel %vm281, %v672, 0
        %v678 = vsel %vm281, %v675, 0
        %680 = vmatprep.subr.mxu0 0.0
        %681 = vmatpush1.xpose.msra.mxu0 %v678
        %682 = vmatprep.subr.mxu0 0.0
        %683 = vmatpush1.xpose.msra.mxu0 0.0
        %684 = vmatprep.subr.mxu0 0.0
        %685 = vmatpush1.xpose.msra.mxu0 0.0
        %686 = vmatprep.subr.mxu0 0.0
        %687 = vmatpush1.xpose.msra.mxu0 0.0
        %688 = vmatprep.subr.mxu0 0.0
        %689 = vmatpush1.xpose.msra.mxu0 0.0
        %690 = vmatprep.subr.mxu0 0.0
        %691 = vmatpush1.xpose.msra.mxu0 0.0
        %692 = vmatprep.subr.mxu0 0.0
        %693 = vmatpush1.xpose.msra.mxu0 0.0
        %694 = vmatprep.subr.mxu0 0.0
        %695 = vmatpush1.xpose.msra.mxu0 0.0
        %696 = vmatprep.subr.mxu0 0.0
        %697 = vmatpush1.xpose.msra.mxu0 0.0
        %698 = vmatprep.subr.mxu0 0.0
        %699 = vmatpush1.xpose.msra.mxu0 0.0
        %700 = vmatprep.subr.mxu0 0.0
        %701 = vmatpush1.xpose.msra.mxu0 0.0
        %702 = vmatprep.subr.mxu0 0.0
        %703 = vmatpush1.xpose.msra.mxu0 0.0
        %704 = vmatprep.subr.mxu0 0.0
        %705 = vmatpush1.xpose.msra.mxu0 0.0
        %706 = vmatprep.subr.mxu0 0.0
        %707 = vmatpush1.xpose.msra.mxu0 0.0
        %708 = vmatprep.subr.mxu0 0.0
        %709 = vmatpush1.xpose.msra.mxu0 0.0
        %710 = vmatprep.subr.mxu0 0.0
        %711 = vmatpush1.xpose.msra.mxu0 0.0
        %712 = vmatprep.subr.mxu0 0.0
        %713 = vmatpush1.xpose.msra.mxu0 0.0
        %714 = vmatprep.subr.mxu0 0.0
        %715 = vmatpush1.xpose.msra.mxu0 0.0
        %716 = vmatprep.subr.mxu0 0.0
        %717 = vmatpush1.xpose.msra.mxu0 0.0
        %718 = vmatprep.subr.mxu0 0.0
        %719 = vmatpush1.xpose.msra.mxu0 0.0
        %720 = vmatprep.subr.mxu0 0.0
        %721 = vmatpush1.xpose.msra.mxu0 0.0
        %722 = vmatprep.subr.mxu0 0.0
        %723 = vmatpush1.xpose.msra.mxu0 0.0
        %724 = vmatprep.subr.mxu0 0.0
        %725 = vmatpush1.xpose.msra.mxu0 0.0
        %726 = vmatprep.subr.mxu0 0.0
        %727 = vmatpush1.xpose.msra.mxu0 0.0
        %728 = vmatprep.subr.mxu0 0.0
        %729 = vmatpush1.xpose.msra.mxu0 0.0
        %730 = vmatprep.subr.mxu0 0.0
        %731 = vmatpush1.xpose.msra.mxu0 0.0
        %732 = vmatprep.subr.mxu0 0.0
        %733 = vmatpush1.xpose.msra.mxu0 0.0
        %734 = vmatprep.subr.mxu0 0.0
        %735 = vmatpush1.xpose.msra.mxu0 0.0
        %736 = vmatprep.subr.mxu0 0.0
        %737 = vmatpush1.xpose.msra.mxu0 0.0
        %738 = vmatprep.subr.mxu0 0.0
        %739 = vmatpush1.xpose.msra.mxu0 0.0
        %740 = vmatprep.subr.mxu0 0.0
        %741 = vmatpush1.xpose.msra.mxu0 0.0
        %742 = vmatprep.subr.mxu0 0.0
        %743 = vmatpush1.xpose.msra.mxu0 0.0
        %744 = vmatprep.mubr.f32.mxu0 0.0
        %745 = vmatmul.mubr.f32.gmra.mrb[0].mxu0 %v676
        %v746 = vpop.f32.mrb[0].mxu0
        %v747 = vadd.f32 0.0, %v746
        %v748 = vpop.f32.mrb[0].mxu0
        %749 = vdwg.mxu0
        %v750 = vmul.f32 %v747, 0.17677669
        %v751 = vsel %vm455, %v750, -inf
        %752 = vmax.xlane.f32.xlu0 %v751
        %v753 = vpop.xlane.xlu0 %752
        %v754 = vsub.f32 %v750, %v753
        %v755 = vmul.f32 %v754, 1.442695
        %v756 = vpow.pop %v755
        %v757 = vsel %vm455, %v756, 0.0
        %758 = vadd.xlane.f32.xlu0 %v757
        %v759 = vpop.xlane.xlu0 %758
        %v760 = vrcp.pop %v759
        %v761 = vmul.f32 %v756, %v760
        %v763 = vsel %vm455, %v761, 0
        %765 = vmatprep.subr.mxu0 0.0
        %766 = vmatpush1.msra.mxu0 %v566
        %767 = vmatprep.subr.mxu0 0.0
        %768 = vmatpush1.msra.mxu0 0.0
        %769 = vmatprep.subr.mxu0 0.0
        %770 = vmatpush1.msra.mxu0 0.0
        %771 = vmatprep.subr.mxu0 0.0
        %772 = vmatpush1.msra.mxu0 0.0
        %773 = vmatprep.subr.mxu0 0.0
        %774 = vmatpush1.msra.mxu0 0.0
        %775 = vmatprep.subr.mxu0 0.0
        %776 = vmatpush1.msra.mxu0 0.0
        %777 = vmatprep.subr.mxu0 0.0
        %778 = vmatpush1.msra.mxu0 0.0
        %779 = vmatprep.subr.mxu0 0.0
        %780 = vmatpush1.msra.mxu0 0.0
        %781 = vmatprep.subr.mxu0 0.0
        %782 = vmatpush1.msra.mxu0 0.0
        %783 = vmatprep.subr.mxu0 0.0
        %784 = vmatpush1.msra.mxu0 0.0
        %785 = vmatprep.subr.mxu0 0.0
        %786 = vmatpush1.msra.mxu0 0.0
        %787 = vmatprep.subr.mxu0 0.0
        %788 = vmatpush1.msra.mxu0 0.0
        %789 = vmatprep.subr.mxu0 0.0
        %790 = vmatpush1.msra.mxu0 0.0
        %791 = vmatprep.subr.mxu0 0.0
        %792 = vmatpush1.msra.mxu0 0.0
        %793 = vmatprep.subr.mxu0 0.0
        %794 = vmatpush1.msra.mxu0 0.0
        %795 = vmatprep.subr.mxu0 0.0
        %796 = vmatpush1.msra.mxu0 0.0
        %797 = vmatprep.subr.mxu0 0.0
        %798 = vmatpush1.msra.mxu0 0.0
        %799 = vmatprep.subr.mxu0 0.0
        %800 = vmatpush1.msra.mxu0 0.0
        %801 = vmatprep.subr.mxu0 0.0
        %802 = vmatpush1.msra.mxu0 0.0
        %803 = vmatprep.subr.mxu0 0.0
        %804 = vmatpush1.msra.mxu0 0.0
        %805 = vmatprep.subr.mxu0 0.0
        %806 = vmatpush1.msra.mxu0 0.0
        %807 = vmatprep.subr.mxu0 0.0
        %808 = vmatpush1.msra.mxu0 0.0
        %809 = vmatprep.subr.mxu0 0.0
        %810 = vmatpush1.msra.mxu0 0.0
        %811 = vmatprep.subr.mxu0 0.0
        %812 = vmatpush1.msra.mxu0 0.0
        %813 = vmatprep.subr.mxu0 0.0
        %814 = vmatpush1.msra.mxu0 0.0
        %815 = vmatprep.subr.mxu0 0.0
        %816 = vmatpush1.msra.mxu0 0.0
        %817 = vmatprep.subr.mxu0 0.0
        %818 = vmatpush1.msra.mxu0 0.0
        %819 = vmatprep.subr.mxu0 0.0
        %820 = vmatpush1.msra.mxu0 0.0
        %821 = vmatprep.subr.mxu0 0.0
        %822 = vmatpush1.msra.mxu0 0.0
        %823 = vmatprep.subr.mxu0 0.0
        %824 = vmatpush1.msra.mxu0 0.0
        %825 = vmatprep.subr.mxu0 0.0
        %826 = vmatpush1.msra.mxu0 0.0
        %827 = vmatprep.subr.mxu0 0.0
        %828 = vmatpush1.msra.mxu0 0.0
        %829 = vmatprep.mubr.f32.mxu0 0.0
        %830 = vmatmul.mubr.f32.gmra.mrb[0].mxu0 %v763
        %v831 = vpop.f32.mrb[0].mxu0
        %v832 = vadd.f32 %v566, %v831
        %v833 = vpop.f32.mrb[0].mxu0
        %834 = vdwg.mxu0
        %v835 = vsel %vm281, %v832, 0.0
        %836 = vadd.xlane.f32.xlu0 %v835
        %v837 = vpop.xlane.xlu0 %836
        %v838 = vmul.f32 %v837, %v543
        %v839 = vsub.f32 %v832, %v838
        %v840 = vmul.f32 %v839, %v839
        %v841 = vsel %vm281, %v840, 0.0
        %842 = vadd.xlane.f32.xlu0 %v841
        %v843 = vpop.xlane.xlu0 %842
        %v844 = vmul.f32 %v843, %v543
        %v845 = vadd.f32 %v844, 1e-05
        %v846 = vrsqrt.pop %v845
        %v847 = vmul.f32 %v839, %v846
        %v848 = vld [vmem:[%s5 + $0x4] sm:$0x1]
        %v849 = vlaneseq
        %v850 = vshrl.u32 %v849, 7
        %v851 = vsub.s32 0, %v850
        %v852 = vrot.slane %v848, %v851
        %v853 = vmul.f32 %v847, %v852
        %v854 = vld [vmem:[%s5 + $0x5] sm:$0x1]
        %v855 = vlaneseq
        %v856 = vshrl.u32 %v855, 7
        %v857 = vsub.s32 0, %v856
        %v858 = vrot.slane %v854, %v857
        %v859 = vadd.f32 %v853, %v858
        %861 = vrot.lane.b32.xlu0 %v859, 32
        %v862 = vpop.permute.xlu0 %861
        %v864 = vsel %vm281, %v565, %v862
        %v865 = vld [vmem:[%s3] sm:$0xff]
        %v866 = vld [vmem:[%s3 + $0x8] sm:$0xff]
        %v867 = vld [vmem:[%s3 + $0x10] sm:$0xff]
        %v868 = vld [vmem:[%s3 + $0x18] sm:$0xff]
        %v869 = vld [vmem:[%s3 + $0x20] sm:$0xff]
        %v870 = vld [vmem:[%s3 + $0x28] sm:$0xff]
        %v871 = vld [vmem:[%s3 + $0x30] sm:$0xff]
        %v872 = vld [vmem:[%s3 + $0x38] sm:$0xff]
        %v873 = vld [vmem:[%s5 + $0x6] sm:$0x1]
        %v874 = vlaneseq
        %v875 = vshrl.u32 %v874, 7
        %v876 = vsub.s32 0, %v875
        %v877 = vrot.slane %v873, %v876
        %v879 = vsel %vm283, %v864, 0
        %881 = vmatprep.subr.mxu0 0.0
        %882 = vmatpush1.msra.mxu0 %v865
        %883 = vmatprep.subr.mxu0 0.0
        %884 = vmatpush1.msra.mxu0 %v866
        %885 = vmatprep.subr.mxu0 0.0
        %886 = vmatpush1.msra.mxu0 %v867
        %887 = vmatprep.subr.mxu0 0.0
        %888 = vmatpush1.msra.mxu0 %v868
        %889 = vmatprep.subr.mxu0 0.0
        %890 = vmatpush1.msra.mxu0 %v869
        %891 = vmatprep.subr.mxu0 0.0
        %892 = vmatpush1.msra.mxu0 %v870
        %893 = vmatprep.subr.mxu0 0.0
        %894 = vmatpush1.msra.mxu0 %v871
        %895 = vmatprep.subr.mxu0 0.0
        %896 = vmatpush1.msra.mxu0 %v872
        %897 = vmatprep.subr.mxu0 0.0
        %898 = vmatpush1.msra.mxu0 0.0
        %899 = vmatprep.subr.mxu0 0.0
        %900 = vmatpush1.msra.mxu0 0.0
        %901 = vmatprep.subr.mxu0 0.0
        %902 = vmatpush1.msra.mxu0 0.0
        %903 = vmatprep.subr.mxu0 0.0
        %904 = vmatpush1.msra.mxu0 0.0
        %905 = vmatprep.subr.mxu0 0.0
        %906 = vmatpush1.msra.mxu0 0.0
        %907 = vmatprep.subr.mxu0 0.0
        %908 = vmatpush1.msra.mxu0 0.0
        %909 = vmatprep.subr.mxu0 0.0
        %910 = vmatpush1.msra.mxu0 0.0
        %911 = vmatprep.subr.mxu0 0.0
        %912 = vmatpush1.msra.mxu0 0.0
        %913 = vmatprep.subr.mxu0 0.0
        %914 = vmatpush1.msra.mxu0 0.0
        %915 = vmatprep.subr.mxu0 0.0
        %916 = vmatpush1.msra.mxu0 0.0
        %917 = vmatprep.subr.mxu0 0.0
        %918 = vmatpush1.msra.mxu0 0.0
        %919 = vmatprep.subr.mxu0 0.0
        %920 = vmatpush1.msra.mxu0 0.0
        %921 = vmatprep.subr.mxu0 0.0
        %922 = vmatpush1.msra.mxu0 0.0
        %923 = vmatprep.subr.mxu0 0.0
        %924 = vmatpush1.msra.mxu0 0.0
        %925 = vmatprep.subr.mxu0 0.0
        %926 = vmatpush1.msra.mxu0 0.0
        %927 = vmatprep.subr.mxu0 0.0
        %928 = vmatpush1.msra.mxu0 0.0
        %929 = vmatprep.subr.mxu0 0.0
        %930 = vmatpush1.msra.mxu0 0.0
        %931 = vmatprep.subr.mxu0 0.0
        %932 = vmatpush1.msra.mxu0 0.0
        %933 = vmatprep.subr.mxu0 0.0
        %934 = vmatpush1.msra.mxu0 0.0
        %935 = vmatprep.subr.mxu0 0.0
        %936 = vmatpush1.msra.mxu0 0.0
        %937 = vmatprep.subr.mxu0 0.0
        %938 = vmatpush1.msra.mxu0 0.0
        %939 = vmatprep.subr.mxu0 0.0
        %940 = vmatpush1.msra.mxu0 0.0
        %941 = vmatprep.subr.mxu0 0.0
        %942 = vmatpush1.msra.mxu0 0.0
        %943 = vmatprep.subr.mxu0 0.0
        %944 = vmatpush1.msra.mxu0 0.0
        %945 = vmatprep.mubr.f32.mxu0 0.0
        %946 = vmatmul.mubr.f32.gmra.mrb[0].mxu0 %v879
        %v947 = vpop.f32.mrb[0].mxu0
        %v948 = vadd.f32 %v877, %v947
        %v949 = vpop.f32.mrb[0].mxu0
        %950 = vdwg.mxu0
        %vm951 = vcmp.gt.f32.partialorder %v948, 0.0
        %v952 = vmin.f32 %v948, 0.0
        %v953 = vmul.f32 %v952, 1.442695
        %v954 = vpow.pop %v953
        %v955 = vsub.f32 %v954, 1.0
        %v956 = vsel %vm951, %v948, %v955
        %v957 = vld [vmem:[%s3 + $0x40] sm:$0xff]
        %v958 = vld [vmem:[%s3 + $0x48] sm:$0xff]
        %v959 = vld [vmem:[%s3 + $0x50] sm:$0xff]
        %v960 = vld [vmem:[%s3 + $0x58] sm:$0xff]
        %v961 = vld [vmem:[%s5 + $0x7] sm:$0x1]
        %v962 = vlaneseq
        %v963 = vshrl.u32 %v962, 7
        %v964 = vsub.s32 0, %v963
        %v965 = vrot.slane %v961, %v964
        %v967 = vsel %vm281, %v956, 0
        %969 = vmatprep.subr.mxu0 0.0
        %970 = vmatpush1.msra.mxu0 %v957
        %971 = vmatprep.subr.mxu0 0.0
        %972 = vmatpush1.msra.mxu0 %v958
        %973 = vmatprep.subr.mxu0 0.0
        %974 = vmatpush1.msra.mxu0 %v959
        %975 = vmatprep.subr.mxu0 0.0
        %976 = vmatpush1.msra.mxu0 %v960
        %977 = vmatprep.subr.mxu0 0.0
        %978 = vmatpush1.msra.mxu0 0.0
        %979 = vmatprep.subr.mxu0 0.0
        %980 = vmatpush1.msra.mxu0 0.0
        %981 = vmatprep.subr.mxu0 0.0
        %982 = vmatpush1.msra.mxu0 0.0
        %983 = vmatprep.subr.mxu0 0.0
        %984 = vmatpush1.msra.mxu0 0.0
        %985 = vmatprep.subr.mxu0 0.0
        %986 = vmatpush1.msra.mxu0 0.0
        %987 = vmatprep.subr.mxu0 0.0
        %988 = vmatpush1.msra.mxu0 0.0
        %989 = vmatprep.subr.mxu0 0.0
        %990 = vmatpush1.msra.mxu0 0.0
        %991 = vmatprep.subr.mxu0 0.0
        %992 = vmatpush1.msra.mxu0 0.0
        %993 = vmatprep.subr.mxu0 0.0
        %994 = vmatpush1.msra.mxu0 0.0
        %995 = vmatprep.subr.mxu0 0.0
        %996 = vmatpush1.msra.mxu0 0.0
        %997 = vmatprep.subr.mxu0 0.0
        %998 = vmatpush1.msra.mxu0 0.0
        %999 = vmatprep.subr.mxu0 0.0
        %1000 = vmatpush1.msra.mxu0 0.0
        %1001 = vmatprep.subr.mxu0 0.0
        %1002 = vmatpush1.msra.mxu0 0.0
        %1003 = vmatprep.subr.mxu0 0.0
        %1004 = vmatpush1.msra.mxu0 0.0
        %1005 = vmatprep.subr.mxu0 0.0
        %1006 = vmatpush1.msra.mxu0 0.0
        %1007 = vmatprep.subr.mxu0 0.0
        %1008 = vmatpush1.msra.mxu0 0.0
        %1009 = vmatprep.subr.mxu0 0.0
        %1010 = vmatpush1.msra.mxu0 0.0
        %1011 = vmatprep.subr.mxu0 0.0
        %1012 = vmatpush1.msra.mxu0 0.0
        %1013 = vmatprep.subr.mxu0 0.0
        %1014 = vmatpush1.msra.mxu0 0.0
        %1015 = vmatprep.subr.mxu0 0.0
        %1016 = vmatpush1.msra.mxu0 0.0
        %1017 = vmatprep.subr.mxu0 0.0
        %1018 = vmatpush1.msra.mxu0 0.0
        %1019 = vmatprep.subr.mxu0 0.0
        %1020 = vmatpush1.msra.mxu0 0.0
        %1021 = vmatprep.subr.mxu0 0.0
        %1022 = vmatpush1.msra.mxu0 0.0
        %1023 = vmatprep.subr.mxu0 0.0
        %1024 = vmatpush1.msra.mxu0 0.0
        %1025 = vmatprep.subr.mxu0 0.0
        %1026 = vmatpush1.msra.mxu0 0.0
        %1027 = vmatprep.subr.mxu0 0.0
        %1028 = vmatpush1.msra.mxu0 0.0
        %1029 = vmatprep.subr.mxu0 0.0
        %1030 = vmatpush1.msra.mxu0 0.0
        %1031 = vmatprep.subr.mxu0 0.0
        %1032 = vmatpush1.msra.mxu0 0.0
        %1033 = vmatprep.mubr.f32.mxu0 0.0
        %1034 = vmatmul.mubr.f32.gmra.mrb[0].mxu0 %v967
        %v1035 = vpop.f32.mrb[0].mxu0
        %v1036 = vadd.f32 %v965, %v1035
        %v1037 = vpop.f32.mrb[0].mxu0
        %1038 = vdwg.mxu0
        %v1039 = vld [vmem:[%s4] sm:$0xff]
        %v1040 = vld [vmem:[%s4 + $0x8] sm:$0xff]
        %v1041 = vld [vmem:[%s4 + $0x10] sm:$0xff]
        %v1042 = vld [vmem:[%s4 + $0x18] sm:$0xff]
        %v1043 = vld [vmem:[%s5 + $0x8] sm:$0x1]
        %v1044 = vlaneseq
        %v1045 = vshrl.u32 %v1044, 7
        %v1046 = vsub.s32 0, %v1045
        %v1047 = vrot.slane %v1043, %v1046
        %v1049 = vsel %vm281, %v1036, 0
        %1051 = vmatprep.subr.mxu0 0.0
        %1052 = vmatpush1.msra.mxu0 %v1039
        %1053 = vmatprep.subr.mxu0 0.0
        %1054 = vmatpush1.msra.mxu0 %v1040
        %1055 = vmatprep.subr.mxu0 0.0
        %1056 = vmatpush1.msra.mxu0 %v1041
        %1057 = vmatprep.subr.mxu0 0.0
        %1058 = vmatpush1.msra.mxu0 %v1042
        %1059 = vmatprep.subr.mxu0 0.0
        %1060 = vmatpush1.msra.mxu0 0.0
        %1061 = vmatprep.subr.mxu0 0.0
        %1062 = vmatpush1.msra.mxu0 0.0
        %1063 = vmatprep.subr.mxu0 0.0
        %1064 = vmatpush1.msra.mxu0 0.0
        %1065 = vmatprep.subr.mxu0 0.0
        %1066 = vmatpush1.msra.mxu0 0.0
        %1067 = vmatprep.subr.mxu0 0.0
        %1068 = vmatpush1.msra.mxu0 0.0
        %1069 = vmatprep.subr.mxu0 0.0
        %1070 = vmatpush1.msra.mxu0 0.0
        %1071 = vmatprep.subr.mxu0 0.0
        %1072 = vmatpush1.msra.mxu0 0.0
        %1073 = vmatprep.subr.mxu0 0.0
        %1074 = vmatpush1.msra.mxu0 0.0
        %1075 = vmatprep.subr.mxu0 0.0
        %1076 = vmatpush1.msra.mxu0 0.0
        %1077 = vmatprep.subr.mxu0 0.0
        %1078 = vmatpush1.msra.mxu0 0.0
        %1079 = vmatprep.subr.mxu0 0.0
        %1080 = vmatpush1.msra.mxu0 0.0
        %1081 = vmatprep.subr.mxu0 0.0
        %1082 = vmatpush1.msra.mxu0 0.0
        %1083 = vmatprep.subr.mxu0 0.0
        %1084 = vmatpush1.msra.mxu0 0.0
        %1085 = vmatprep.subr.mxu0 0.0
        %1086 = vmatpush1.msra.mxu0 0.0
        %1087 = vmatprep.subr.mxu0 0.0
        %1088 = vmatpush1.msra.mxu0 0.0
        %1089 = vmatprep.subr.mxu0 0.0
        %1090 = vmatpush1.msra.mxu0 0.0
        %1091 = vmatprep.subr.mxu0 0.0
        %1092 = vmatpush1.msra.mxu0 0.0
        %1093 = vmatprep.subr.mxu0 0.0
        %1094 = vmatpush1.msra.mxu0 0.0
        %1095 = vmatprep.subr.mxu0 0.0
        %1096 = vmatpush1.msra.mxu0 0.0
        %1097 = vmatprep.subr.mxu0 0.0
        %1098 = vmatpush1.msra.mxu0 0.0
        %1099 = vmatprep.subr.mxu0 0.0
        %1100 = vmatpush1.msra.mxu0 0.0
        %1101 = vmatprep.subr.mxu0 0.0
        %1102 = vmatpush1.msra.mxu0 0.0
        %1103 = vmatprep.subr.mxu0 0.0
        %1104 = vmatpush1.msra.mxu0 0.0
        %1105 = vmatprep.subr.mxu0 0.0
        %1106 = vmatpush1.msra.mxu0 0.0
        %1107 = vmatprep.subr.mxu0 0.0
        %1108 = vmatpush1.msra.mxu0 0.0
        %1109 = vmatprep.subr.mxu0 0.0
        %1110 = vmatpush1.msra.mxu0 0.0
        %1111 = vmatprep.subr.mxu0 0.0
        %1112 = vmatpush1.msra.mxu0 0.0
        %1113 = vmatprep.subr.mxu0 0.0
        %1114 = vmatpush1.msra.mxu0 0.0
        %1115 = vmatprep.mubr.f32.mxu0 0.0
        %1116 = vmatmul.mubr.f32.gmra.mrb[0].mxu0 %v1049
        %v1117 = vpop.f32.mrb[0].mxu0
        %v1118 = vadd.f32 %v1047, %v1117
        %v1119 = vpop.f32.mrb[0].mxu0
        %1120 = vdwg.mxu0
        %v1121 = vxor.u32 %v1118, 2147483648
        %v1122 = vmul.f32 %v1121, 1.442695
        %v1123 = vpow.pop %v1122
        %v1124 = vadd.f32 %v1123, 1.0
        %v1125 = vrcp.pop %v1124
        %v1126 = vmul.f32 1.0, %v1125
        %1128 = vrot.lane.b32.xlu0 %v1126, 96
        %v1129 = vpop.permute.xlu0 %1128
        %v1131 = vmul.f32 %v1118, %v1129
        %v1132 = vadd.f32 %v1131, %v565
        %v1133 = vsel %vm281, %v1132, 0.0
        %1134 = vadd.xlane.f32.xlu0 %v1133
        %v1135 = vpop.xlane.xlu0 %1134
        %v1136 = vmul.f32 %v1135, %v543
        %v1137 = vsub.f32 %v1132, %v1136
        %v1138 = vmul.f32 %v1137, %v1137
        %v1139 = vsel %vm281, %v1138, 0.0
        %1140 = vadd.xlane.f32.xlu0 %v1139
        %v1141 = vpop.xlane.xlu0 %1140
        %v1142 = vmul.f32 %v1141, %v543
        %v1143 = vadd.f32 %v1142, 1e-05
        %v1144 = vrsqrt.pop %v1143
        %v1145 = vmul.f32 %v1137, %v1144
        %v1146 = vld [vmem:[%s5 + $0x9] sm:$0x1]
        %v1147 = vlaneseq
        %v1148 = vshrl.u32 %v1147, 7
        %v1149 = vsub.s32 0, %v1148
        %v1150 = vrot.slane %v1146, %v1149
        %v1151 = vmul.f32 %v1145, %v1150
        %v1152 = vld [vmem:[%s5 + $0xa] sm:$0x1]
        %v1153 = vlaneseq
        %v1154 = vshrl.u32 %v1153, 7
        %v1155 = vsub.s32 0, %v1154
        %v1156 = vrot.slane %v1152, %v1155
        %v1157 = vadd.f32 %v1151, %v1156
        %1158 = vst.msk [vmem:[%s255] sm:$0xff] %vm281, %v1157
        %s1159 = sand.u32 %s164, 1
        %s1160 = scalar_lea.sflag [#allocation3], %s1159
        %s1161 = sand.u32 %s164, 1
        %s1162 = smul.addr %s1161, 8
        %s1163 = scalar_lea.vmem [#allocation2], %s1162
        // Predicated region
        $region45: #{dcsa_forward.1} parent=43 // pred_check
          %p1164 = pneg %p174
        $region46: #{dcsa_forward.1} parent=43 // pred_check_branch
          %1166 = sbr.rel (%p1164) target = $region48
        $region47: #{dcsa_forward.1} parent=43 // pred_region
          %s1168 = ssub.s32 128, 128
          %1169 = vsyncadd %s1160, %s1168
          %s1170 = smul.addr %s20, 128
          %s1171 = scalar_lea.hbm %s6, %s1170
          %s1173 = sshll.u32 %s1163, 4
          %s1174 = int_to_ptr.vmem [resolvable:$true] %s1173
          %1176 = dma.vmem_to_hbm [thread:$0]  %s1174, 128, %s1171, %s1160
        $region48: #{dcsa_forward.1} parent=43 // pred_fallthru
          _
      $region44: #{dcsa_forward.1} parent=5 // pred_fallthru
        _
      %p1177 = scmp.le.s32.totalorder 2, %s15
      // Predicated region
      $region49: #{dcsa_forward.1} parent=5 // pred_check
        %p1178 = pneg %p1177
      $region50: #{dcsa_forward.1} parent=5 // pred_check_branch
        %1180 = sbr.rel (%p1178) target = $region52
      $region51: #{dcsa_forward.1} parent=5 // pred_region
        %s1181 = ssub.s32 %s15, 2
        // Predicated region
        $region53: #{dcsa_forward.1} parent=51 // pred_check
          %p1182 = pneg %p180
        $region54: #{dcsa_forward.1} parent=51 // pred_check_branch
          %1184 = sbr.rel (%p1182) target = $region56
        $region55: #{dcsa_forward.1} parent=51 // pred_region
          %s1185 = sand.u32 %s165, 1
          %s1186 = scalar_lea.sflag [#allocation3], %s1185
          %s1187 = sand.u32 %s165, 1
          %s1188 = smul.addr %s1187, 8
          %s1189 = scalar_lea.vmem [#allocation2], %s1188
          %1190 = dma.done %s1186, 128
        $region56: #{dcsa_forward.1} parent=51 // pred_fallthru
          _
      $region52: #{dcsa_forward.1} parent=5 // pred_fallthru
        _
    $region6: #{dcsa_forward.1} parent=1 // loop_footer
      %s19 = sadd.s32 1, %s15
    $region7: #{dcsa_forward.1} parent=1 // loop_footer_branch
      %14 = sbr.rel target = $region3
    $region8: #{dcsa_forward.1} parent=1 // loop_exit
      _
    %1191 = vsyncpa [#allocation3], 1
    %s1192 = scalar_lea.sflag [#allocation3], 1
    %1193 = vsyncpa %s1192, 1

</llo_original>
